<compile_context>
chip_gen: v7x
topology: tpu7x:2x2x1
jax: 0.10.0
libtpu: 0.0.40
codegen_flags: <defaults>
</compile_context>

<pallas_src>
import jax
import jax.numpy as jnp
from jax import lax
from jax.experimental import pallas as pl
from jax.experimental.pallas import tpu as pltpu


def _round_up(x, m):
    return (x + m - 1) // m * m


def _sigmoid(x):
    # 1/(1+exp(-x)); saturates exactly to 0.0 / 1.0 in f32 for large |x|,
    # which the padded-timestep identity step relies on.
    return 1.0 / (1.0 + jnp.exp(-x))


def _encoder_kernel(gi_ref, whh_ref, bhh_ref, whead_ref, bhead_ref,
                    out_ref, h_ref):
    """GRU recurrence over one (batch-tile, time-chunk) grid cell.

    gi_ref    : [Tc, Bt, 3*Hp]  precomputed input projections (E@W_ih+b_ih)[ids],
                                gate-aligned (each gate in its own 128-lane block)
    whh_ref   : [Hp, 3*Hp]      GRU hidden weights (transposed, gate-aligned)
    bhh_ref   : [1, 3*Hp]       GRU hidden bias (gate-aligned)
    whead_ref : [Hp, Dp]        fused [fc_mu | fc_log_var] weights
    bhead_ref : [1, Dp]         fused head bias
    out_ref   : [Bt, Dp]        fused (mu | log_var), written on last time chunk
    h_ref     : VMEM [Bt, Hp]   hidden state carried across time chunks
    """
    t_chunk = pl.program_id(1)
    n_chunks = pl.num_programs(1)
    t_c, b_tile, g3 = gi_ref.shape
    h_pad = h_ref.shape[1]

    @pl.when(t_chunk == 0)
    def _init():
        h_ref[...] = jnp.zeros_like(h_ref)       # torch GRU default h_0 = 0

    # Hoisted bias broadcast (JAX does not CSE broadcast_in_dim inside loops).
    b_hh = jnp.broadcast_to(bhh_ref[...], (b_tile, g3))

    def step(t, h):
        gi_t = gi_ref[t]                                           # [Bt, 3Hp]
        # Read W_hh inside the loop body so the 48-vreg weight tile is streamed
        # to the MXU per matmul instead of being held live across the whole
        # unrolled recurrence (which would spill near the 64-vreg limit).
        gh = jnp.dot(h, whh_ref[...],
                     preferred_element_type=jnp.float32) + b_hh
        r = _sigmoid(gi_t[:, :h_pad] + gh[:, :h_pad])
        z = _sigmoid(gi_t[:, h_pad:2 * h_pad] + gh[:, h_pad:2 * h_pad])
        # PyTorch GRU: n = tanh(i_n + r * (h @ W_hn + b_hn))  (b_hn inside r*)
        n = jnp.tanh(gi_t[:, 2 * h_pad:] + r * gh[:, 2 * h_pad:])
        # h' = (1-z)*n + z*h  rewritten with one fewer VALU op on the serial path.
        return n + z * (h - n)

    # Partial unroll: LLO scheduling visibility without code-size/vreg blowup.
    h = lax.fori_loop(0, t_c, step, h_ref[...], unroll=8)
    h_ref[...] = h

    # Fused mu/log_var head: one MXU push + one lane-dense store, last chunk only.
    @pl.when(t_chunk == n_chunks - 1)
    def _finalize():
        out_ref[...] = (jnp.dot(h, whead_ref[...],
                                preferred_element_type=jnp.float32)
                        + bhead_ref[...])


def encoder_forward(x, params, *, time_chunk=128, batch_tile=8):
    """x: int32 token ids [B, T]. Returns (mu, log_var), each [B, latent_dim]."""
    emb = params["embed"]                   # [V, H]
    w_ih_t = params["w_ih_t"]               # [H, 3H]  (gate order r, z, n)
    b_ih = params["b_ih"]                   # [1, 3H]
    w_hh_t = params["w_hh_t"]               # [H, 3H]
    b_hh = params["b_hh"]                   # [1, 3H]
    w_mu_t, b_mu = params["w_mu_t"], params["b_mu"]     # [H, L], [1, L]
    w_lv_t, b_lv = params["w_lv_t"], params["b_lv"]     # [H, L], [1, L]

    B, T = x.shape
    V, H = emb.shape
    L = w_mu_t.shape[1]
    f32 = jnp.float32

    # Hardware-tile padding: batch tile -> x8 sublanes, hidden -> x128 lanes
    # per gate, fused head width -> x128 lanes.
    b_tile = _round_up(max(batch_tile, 8), 8)
    b_pad = _round_up(B, b_tile)
    h_pad = _round_up(H, 128)
    d_out = _round_up(2 * L, 128)
    t_c = _round_up(min(T, time_chunk), 8)  # timesteps per grid step
    t_pad = _round_up(T, t_c)

    # ---- Gate-aligned hidden weights / bias: gate g occupies lanes
    #      [g*h_pad, g*h_pad + H).
    w_hh_pad = jnp.zeros((h_pad, 3 * h_pad), f32)
    b_hh_pad = jnp.zeros((1, 3 * h_pad), f32)
    for g in range(3):
        w_hh_pad = w_hh_pad.at[:H, g * h_pad:g * h_pad + H].set(w_hh_t[:, g * H:(g + 1) * H])
        b_hh_pad = b_hh_pad.at[:, g * h_pad:g * h_pad + H].set(b_hh[:, g * H:(g + 1) * H])

    # ---- Fused output head [fc_mu | fc_log_var].
    w_head = jnp.zeros((h_pad, d_out), f32)
    w_head = w_head.at[:H, :L].set(w_mu_t).at[:H, L:2 * L].set(w_lv_t)
    b_head = jnp.zeros((1, d_out), f32)
    b_head = b_head.at[:, :L].set(b_mu).at[:, L:2 * L].set(b_lv)

    # ---- Embedding lookup + input projection fused in weight space:
    #      (E @ W_ih + b_ih)[ids]  ==  E[ids] @ W_ih + b_ih, streamed as
    #      gate-aligned, time-major [t_pad, b_pad, 3*h_pad] blocks.
    proj = jnp.dot(emb, w_ih_t, precision=lax.Precision.HIGHEST) + b_ih   # [V, 3H]
    gi = jnp.take(proj, x.astype(jnp.int32), axis=0)                      # [B, T, 3H]
    gi = jnp.transpose(gi, (1, 0, 2))                                     # [T, B, 3H]
    gi_pad = jnp.zeros((t_pad, b_pad, 3 * h_pad), f32)
    for g in range(3):
        gi_pad = gi_pad.at[:T, :B, g * h_pad:g * h_pad + H].set(gi[:, :, g * H:(g + 1) * H])
    if t_pad > T:
        # Padded timesteps -> exact identity GRU step: r = 0, z = 1, n = 0.
        gi_pad = gi_pad.at[T:, :, 0:h_pad].set(-3e4)          # r -> sigmoid(-3e4) == 0.0
        gi_pad = gi_pad.at[T:, :, h_pad:2 * h_pad].set(3e4)   # z -> sigmoid(+3e4) == 1.0
        # n-gate input stays 0 -> n = tanh(0 + 0*gh_n) == 0.0 -> h' == h exactly.

    grid = (b_pad // b_tile, t_pad // t_c)   # (parallel batch tiles, serial time chunks)

    out = pl.pallas_call(
        _encoder_kernel,
        out_shape=jax.ShapeDtypeStruct((b_pad, d_out), f32),
        grid=grid,
        in_specs=[
            pl.BlockSpec((t_c, b_tile, 3 * h_pad), lambda b, t: (t, b, 0)),   # streamed gi
            pl.BlockSpec((h_pad, 3 * h_pad), lambda b, t: (0, 0)),            # resident weights
            pl.BlockSpec((1, 3 * h_pad), lambda b, t: (0, 0)),
            pl.BlockSpec((h_pad, d_out), lambda b, t: (0, 0)),
            pl.BlockSpec((1, d_out), lambda b, t: (0, 0)),
        ],
        out_specs=pl.BlockSpec((b_tile, d_out), lambda b, t: (b, 0)),
        scratch_shapes=[
            pltpu.VMEM((b_tile, h_pad), f32),                                 # hidden state
        ],
        compiler_params=pltpu.CompilerParams(
            # batch axis parallel (lights up both v7x TensorCores), time axis serial
            dimension_semantics=("parallel", "arbitrary"),
            # actual footprint is a few MiB at default tiles; 32 MiB is safe on
            # v5e/v6e (128 MiB) and v7x (64 MiB physical).
            vmem_limit_bytes=32 * 1024 * 1024,
        ),
    )(gi_pad, w_hh_pad, b_hh_pad, w_head, b_head)

    mu = out[:B, :L]
    log_var = out[:B, L:2 * L]
    return mu, log_var


def init_params(key, input_dim, hidden_dim, latent_dim):
    """Deterministic synthetic parameters matching the PyTorch module's shapes."""
    ks = jax.random.split(key, 9)
    H, L = hidden_dim, latent_dim
    scale = 0.1
    return {
        # nn.Embedding(input_dim, hidden_dim)
        "embed": scale * jax.random.normal(ks[0], (input_dim, H), jnp.float32),
        # nn.GRU: weight_ih_l0 [3H, H], weight_hh_l0 [3H, H] -> stored transposed
        "w_ih_t": scale * jax.random.normal(ks[1], (H, 3 * H), jnp.float32),
        "w_hh_t": scale * jax.random.normal(ks[2], (H, 3 * H), jnp.float32),
        "b_ih": scale * jax.random.normal(ks[3], (1, 3 * H), jnp.float32),
        "b_hh": scale * jax.random.normal(ks[4], (1, 3 * H), jnp.float32),
        # nn.Linear(hidden_dim, latent_dim) x2 -> stored transposed
        "w_mu_t": scale * jax.random.normal(ks[5], (H, L), jnp.float32),
        "b_mu": scale * jax.random.normal(ks[6], (1, L), jnp.float32),
        "w_lv_t": scale * jax.random.normal(ks[7], (H, L), jnp.float32),
        "b_lv": scale * jax.random.normal(ks[8], (1, L), jnp.float32),
    }


def _reference_forward(x, params):
    """Pure-JAX reference mirroring torch GRU semantics (sanity check)."""
    hi = lax.Precision.HIGHEST
    emb = jnp.take(params["embed"], x, axis=0)            # [B, T, H]
    B, T, H = emb.shape
    h = jnp.zeros((B, H), jnp.float32)

    def step(h, x_t):
        gi = jnp.dot(x_t, params["w_ih_t"], precision=hi) + params["b_ih"]
        gh = jnp.dot(h, params["w_hh_t"], precision=hi) + params["b_hh"]
        i_r, i_z, i_n = jnp.split(gi, 3, axis=1)
        h_r, h_z, h_n = jnp.split(gh, 3, axis=1)
        r = jax.nn.sigmoid(i_r + h_r)
        z = jax.nn.sigmoid(i_z + h_z)
        n = jnp.tanh(i_n + r * h_n)
        h_new = (1.0 - z) * n + z * h
        return h_new, None

    h, _ = lax.scan(step, h, jnp.transpose(emb, (1, 0, 2)))
    mu = jnp.dot(h, params["w_mu_t"], precision=hi) + params["b_mu"]
    lv = jnp.dot(h, params["w_lv_t"], precision=hi) + params["b_lv"]
    return mu, lv


if __name__ == "__main__":
    # Small shapes consistent with the module: vocab=16, hidden=32, latent=16.
    input_dim, hidden_dim, latent_dim = 16, 32, 16
    B, T = 2, 8

    key = jax.random.PRNGKey(0)
    pkey, xkey = jax.random.split(key)
    params = init_params(pkey, input_dim, hidden_dim, latent_dim)
    x = jax.random.randint(xkey, (B, T), 0, input_dim, dtype=jnp.int32)

    fwd = jax.jit(encoder_forward)
    mu, log_var = jax.block_until_ready(fwd(x, params))

    mu_ref, lv_ref = _reference_forward(x, params)
    assert mu.shape == (B, latent_dim) and log_var.shape == (B, latent_dim)
    assert jnp.allclose(mu, mu_ref, atol=1e-3), "mu mismatch vs reference"
    assert jnp.allclose(log_var, lv_ref, atol=1e-3), "log_var mismatch vs reference"

    print("KERNEL_OK")
</pallas_src>

<mosaic_0001>
module attributes {stable_mosaic.version = 11 : i64} {
  func.func @_encoder_kernel(%arg0: i32, %arg1: i32, %arg2: memref<8x8x384xf32, #tpu.memory_space<vmem>>, %arg3: memref<128x384xf32, #tpu.memory_space<vmem>>, %arg4: memref<1x384xf32, #tpu.memory_space<vmem>>, %arg5: memref<128x128xf32, #tpu.memory_space<vmem>>, %arg6: memref<1x128xf32, #tpu.memory_space<vmem>>, %arg7: memref<8x128xf32, #tpu.memory_space<vmem>>, %arg8: memref<8x128xf32, #tpu.memory_space<vmem>>) attributes {dimension_semantics = [#tpu.dimension_semantics<parallel>, #tpu.dimension_semantics<arbitrary>], iteration_bounds = array<i64: 1, 1>, scalar_prefetch = 0 : i64, scratch_operands = 1 : i64, tpu.core_type = #tpu.core_type<tc>, window_params = [{transform_indices = @transform_0, window_bounds = array<i64: 8, 8, 384>}, {pipeline_mode = #tpu.pipeline_mode<synchronous>, transform_indices = @transform_1, window_bounds = array<i64: 128, 384>}, {pipeline_mode = #tpu.pipeline_mode<synchronous>, transform_indices = @transform_2, window_bounds = array<i64: 1, 384>}, {pipeline_mode = #tpu.pipeline_mode<synchronous>, transform_indices = @transform_3, window_bounds = array<i64: 128, 128>}, {pipeline_mode = #tpu.pipeline_mode<synchronous>, transform_indices = @transform_4, window_bounds = array<i64: 1, 128>}, {transform_indices = @transform_5, window_bounds = array<i64: 8, 128>}]} {
    %c0_i32 = arith.constant 0 : i32
    %0 = arith.cmpi eq, %arg1, %c0_i32 : i32
    %1 = arith.extui %0 : i1 to i32
    %c0_i32_0 = arith.constant 0 : i32
    %2 = arith.cmpi ne, %1, %c0_i32_0 : i32
    scf.if %2 {
      %cst_96 = arith.constant 0.000000e+00 : f32
      %283 = vector.broadcast %cst_96 : f32 to vector<8x128xf32>
      %c0_97 = arith.constant 0 : index
      %c0_98 = arith.constant 0 : index
      %284 = vector.load %arg8[%c0_97, %c0_98] : memref<8x128xf32, #tpu.memory_space<vmem>>, vector<8x128xf32>
      tpu.vector_store %arg8[%c0_97, %c0_98], %283 {strides = array<i32>} : memref<8x128xf32, #tpu.memory_space<vmem>>, vector<8x128xf32>,
    } else {
    }
    %c0 = arith.constant 0 : index
    %c0_1 = arith.constant 0 : index
    %3 = vector.load %arg4[%c0, %c0_1] : memref<1x384xf32, #tpu.memory_space<vmem>>, vector<1x384xf32>
    %4 = vector.shape_cast %3 : vector<1x384xf32> to vector<1x384xf32>
    %5 = vector.broadcast %4 : vector<1x384xf32> to vector<8x384xf32>
    %c0_2 = arith.constant 0 : index
    %c0_3 = arith.constant 0 : index
    %6 = vector.load %arg8[%c0_2, %c0_3] : memref<8x128xf32, #tpu.memory_space<vmem>>, vector<8x128xf32>
    %c0_i32_4 = arith.constant 0 : i32
    %7 = arith.index_cast %c0_i32_4 : i32 to index
    %c0_5 = arith.constant 0 : index
    %c0_6 = arith.constant 0 : index
    %8 = vector.load %arg2[%7, %c0_5, %c0_6] : memref<8x8x384xf32, #tpu.memory_space<vmem>>, vector<1x8x384xf32>
    %9 = vector.shape_cast %8 : vector<1x8x384xf32> to vector<8x384xf32>
    %c0_7 = arith.constant 0 : index
    %c0_8 = arith.constant 0 : index
    %10 = vector.load %arg3[%c0_7, %c0_8] : memref<128x384xf32, #tpu.memory_space<vmem>>, vector<128x384xf32>
    %cst = arith.constant dense<0.000000e+00> : vector<8x384xf32>
    %11 = tpu.matmul %6, %10, %cst {dimension_numbers = #tpu.dot_dimension_numbers<[1], [0], [0], [1], [0, 0, 1, 1], [], []>} : vector<8x128xf32>, vector<128x384xf32>, vector<8x384xf32> -> vector<8x384xf32>
    %12 = arith.addf %11, %5 : vector<8x384xf32>
    %13 = vector.extract_strided_slice %9 {offsets = [0, 0], sizes = [8, 128], strides = [1, 1]} : vector<8x384xf32> to vector<8x128xf32>
    %14 = vector.extract_strided_slice %12 {offsets = [0, 0], sizes = [8, 128], strides = [1, 1]} : vector<8x384xf32> to vector<8x128xf32>
    %15 = arith.addf %13, %14 : vector<8x128xf32>
    %cst_9 = arith.constant 0.000000e+00 : f32
    %16 = vector.broadcast %cst_9 : f32 to vector<8x128xf32>
    %17 = arith.subf %16, %15 : vector<8x128xf32>
    %18 = math.exp %17 : vector<8x128xf32>
    %cst_10 = arith.constant 1.000000e+00 : f32
    %19 = vector.broadcast %cst_10 : f32 to vector<8x128xf32>
    %20 = arith.addf %19, %18 : vector<8x128xf32>
    %cst_11 = arith.constant 1.000000e+00 : f32
    %21 = vector.broadcast %cst_11 : f32 to vector<8x128xf32>
    %22 = arith.divf %21, %20 : vector<8x128xf32>
    %23 = vector.extract_strided_slice %9 {offsets = [0, 128], sizes = [8, 128], strides = [1, 1]} : vector<8x384xf32> to vector<8x128xf32>
    %24 = vector.extract_strided_slice %12 {offsets = [0, 128], sizes = [8, 128], strides = [1, 1]} : vector<8x384xf32> to vector<8x128xf32>
    %25 = arith.addf %23, %24 : vector<8x128xf32>
    %cst_12 = arith.constant 0.000000e+00 : f32
    %26 = vector.broadcast %cst_12 : f32 to vector<8x128xf32>
    %27 = arith.subf %26, %25 : vector<8x128xf32>
    %28 = math.exp %27 : vector<8x128xf32>
    %cst_13 = arith.constant 1.000000e+00 : f32
    %29 = vector.broadcast %cst_13 : f32 to vector<8x128xf32>
    %30 = arith.addf %29, %28 : vector<8x128xf32>
    %cst_14 = arith.constant 1.000000e+00 : f32
    %31 = vector.broadcast %cst_14 : f32 to vector<8x128xf32>
    %32 = arith.divf %31, %30 : vector<8x128xf32>
    %33 = vector.extract_strided_slice %9 {offsets = [0, 256], sizes = [8, 128], strides = [1, 1]} : vector<8x384xf32> to vector<8x128xf32>
    %34 = vector.extract_strided_slice %12 {offsets = [0, 256], sizes = [8, 128], strides = [1, 1]} : vector<8x384xf32> to vector<8x128xf32>
    %35 = arith.mulf %22, %34 : vector<8x128xf32>
    %36 = arith.addf %33, %35 : vector<8x128xf32>
    %37 = math.tanh %36 : vector<8x128xf32>
    %38 = arith.subf %6, %37 : vector<8x128xf32>
    %39 = arith.mulf %32, %38 : vector<8x128xf32>
    %40 = arith.addf %37, %39 : vector<8x128xf32>
    %c1_i32 = arith.constant 1 : i32
    %41 = arith.index_cast %c1_i32 : i32 to index
    %c0_15 = arith.constant 0 : index
    %c0_16 = arith.constant 0 : index
    %42 = vector.load %arg2[%41, %c0_15, %c0_16] : memref<8x8x384xf32, #tpu.memory_space<vmem>>, vector<1x8x384xf32>
    %43 = vector.shape_cast %42 : vector<1x8x384xf32> to vector<8x384xf32>
    %c0_17 = arith.constant 0 : index
    %c0_18 = arith.constant 0 : index
    %44 = vector.load %arg3[%c0_17, %c0_18] : memref<128x384xf32, #tpu.memory_space<vmem>>, vector<128x384xf32>
    %cst_19 = arith.constant dense<0.000000e+00> : vector<8x384xf32>
    %45 = tpu.matmul %40, %44, %cst_19 {dimension_numbers = #tpu.dot_dimension_numbers<[1], [0], [0], [1], [0, 0, 1, 1], [], []>} : vector<8x128xf32>, vector<128x384xf32>, vector<8x384xf32> -> vector<8x384xf32>
    %46 = arith.addf %45, %5 : vector<8x384xf32>
    %47 = vector.extract_strided_slice %43 {offsets = [0, 0], sizes = [8, 128], strides = [1, 1]} : vector<8x384xf32> to vector<8x128xf32>
    %48 = vector.extract_strided_slice %46 {offsets = [0, 0], sizes = [8, 128], strides = [1, 1]} : vector<8x384xf32> to vector<8x128xf32>
    %49 = arith.addf %47, %48 : vector<8x128xf32>
    %cst_20 = arith.constant 0.000000e+00 : f32
    %50 = vector.broadcast %cst_20 : f32 to vector<8x128xf32>
    %51 = arith.subf %50, %49 : vector<8x128xf32>
    %52 = math.exp %51 : vector<8x128xf32>
    %cst_21 = arith.constant 1.000000e+00 : f32
    %53 = vector.broadcast %cst_21 : f32 to vector<8x128xf32>
    %54 = arith.addf %53, %52 : vector<8x128xf32>
    %cst_22 = arith.constant 1.000000e+00 : f32
    %55 = vector.broadcast %cst_22 : f32 to vector<8x128xf32>
    %56 = arith.divf %55, %54 : vector<8x128xf32>
    %57 = vector.extract_strided_slice %43 {offsets = [0, 128], sizes = [8, 128], strides = [1, 1]} : vector<8x384xf32> to vector<8x128xf32>
    %58 = vector.extract_strided_slice %46 {offsets = [0, 128], sizes = [8, 128], strides = [1, 1]} : vector<8x384xf32> to vector<8x128xf32>
    %59 = arith.addf %57, %58 : vector<8x128xf32>
    %cst_23 = arith.constant 0.000000e+00 : f32
    %60 = vector.broadcast %cst_23 : f32 to vector<8x128xf32>
    %61 = arith.subf %60, %59 : vector<8x128xf32>
    %62 = math.exp %61 : vector<8x128xf32>
    %cst_24 = arith.constant 1.000000e+00 : f32
    %63 = vector.broadcast %cst_24 : f32 to vector<8x128xf32>
    %64 = arith.addf %63, %62 : vector<8x128xf32>
    %cst_25 = arith.constant 1.000000e+00 : f32
    %65 = vector.broadcast %cst_25 : f32 to vector<8x128xf32>
    %66 = arith.divf %65, %64 : vector<8x128xf32>
    %67 = vector.extract_strided_slice %43 {offsets = [0, 256], sizes = [8, 128], strides = [1, 1]} : vector<8x384xf32> to vector<8x128xf32>
    %68 = vector.extract_strided_slice %46 {offsets = [0, 256], sizes = [8, 128], strides = [1, 1]} : vector<8x384xf32> to vector<8x128xf32>
    %69 = arith.mulf %56, %68 : vector<8x128xf32>
    %70 = arith.addf %67, %69 : vector<8x128xf32>
    %71 = math.tanh %70 : vector<8x128xf32>
    %72 = arith.subf %40, %71 : vector<8x128xf32>
    %73 = arith.mulf %66, %72 : vector<8x128xf32>
    %74 = arith.addf %71, %73 : vector<8x128xf32>
    %c2_i32 = arith.constant 2 : i32
    %75 = arith.index_cast %c2_i32 : i32 to index
    %c0_26 = arith.constant 0 : index
    %c0_27 = arith.constant 0 : index
    %76 = vector.load %arg2[%75, %c0_26, %c0_27] : memref<8x8x384xf32, #tpu.memory_space<vmem>>, vector<1x8x384xf32>
    %77 = vector.shape_cast %76 : vector<1x8x384xf32> to vector<8x384xf32>
    %c0_28 = arith.constant 0 : index
    %c0_29 = arith.constant 0 : index
    %78 = vector.load %arg3[%c0_28, %c0_29] : memref<128x384xf32, #tpu.memory_space<vmem>>, vector<128x384xf32>
    %cst_30 = arith.constant dense<0.000000e+00> : vector<8x384xf32>
    %79 = tpu.matmul %74, %78, %cst_30 {dimension_numbers = #tpu.dot_dimension_numbers<[1], [0], [0], [1], [0, 0, 1, 1], [], []>} : vector<8x128xf32>, vector<128x384xf32>, vector<8x384xf32> -> vector<8x384xf32>
    %80 = arith.addf %79, %5 : vector<8x384xf32>
    %81 = vector.extract_strided_slice %77 {offsets = [0, 0], sizes = [8, 128], strides = [1, 1]} : vector<8x384xf32> to vector<8x128xf32>
    %82 = vector.extract_strided_slice %80 {offsets = [0, 0], sizes = [8, 128], strides = [1, 1]} : vector<8x384xf32> to vector<8x128xf32>
    %83 = arith.addf %81, %82 : vector<8x128xf32>
    %cst_31 = arith.constant 0.000000e+00 : f32
    %84 = vector.broadcast %cst_31 : f32 to vector<8x128xf32>
    %85 = arith.subf %84, %83 : vector<8x128xf32>
    %86 = math.exp %85 : vector<8x128xf32>
    %cst_32 = arith.constant 1.000000e+00 : f32
    %87 = vector.broadcast %cst_32 : f32 to vector<8x128xf32>
    %88 = arith.addf %87, %86 : vector<8x128xf32>
    %cst_33 = arith.constant 1.000000e+00 : f32
    %89 = vector.broadcast %cst_33 : f32 to vector<8x128xf32>
    %90 = arith.divf %89, %88 : vector<8x128xf32>
    %91 = vector.extract_strided_slice %77 {offsets = [0, 128], sizes = [8, 128], strides = [1, 1]} : vector<8x384xf32> to vector<8x128xf32>
    %92 = vector.extract_strided_slice %80 {offsets = [0, 128], sizes = [8, 128], strides = [1, 1]} : vector<8x384xf32> to vector<8x128xf32>
    %93 = arith.addf %91, %92 : vector<8x128xf32>
    %cst_34 = arith.constant 0.000000e+00 : f32
    %94 = vector.broadcast %cst_34 : f32 to vector<8x128xf32>
    %95 = arith.subf %94, %93 : vector<8x128xf32>
    %96 = math.exp %95 : vector<8x128xf32>
    %cst_35 = arith.constant 1.000000e+00 : f32
    %97 = vector.broadcast %cst_35 : f32 to vector<8x128xf32>
    %98 = arith.addf %97, %96 : vector<8x128xf32>
    %cst_36 = arith.constant 1.000000e+00 : f32
    %99 = vector.broadcast %cst_36 : f32 to vector<8x128xf32>
    %100 = arith.divf %99, %98 : vector<8x128xf32>
    %101 = vector.extract_strided_slice %77 {offsets = [0, 256], sizes = [8, 128], strides = [1, 1]} : vector<8x384xf32> to vector<8x128xf32>
    %102 = vector.extract_strided_slice %80 {offsets = [0, 256], sizes = [8, 128], strides = [1, 1]} : vector<8x384xf32> to vector<8x128xf32>
    %103 = arith.mulf %90, %102 : vector<8x128xf32>
    %104 = arith.addf %101, %103 : vector<8x128xf32>
    %105 = math.tanh %104 : vector<8x128xf32>
    %106 = arith.subf %74, %105 : vector<8x128xf32>
    %107 = arith.mulf %100, %106 : vector<8x128xf32>
    %108 = arith.addf %105, %107 : vector<8x128xf32>
    %c3_i32 = arith.constant 3 : i32
    %109 = arith.index_cast %c3_i32 : i32 to index
    %c0_37 = arith.constant 0 : index
    %c0_38 = arith.constant 0 : index
    %110 = vector.load %arg2[%109, %c0_37, %c0_38] : memref<8x8x384xf32, #tpu.memory_space<vmem>>, vector<1x8x384xf32>
    %111 = vector.shape_cast %110 : vector<1x8x384xf32> to vector<8x384xf32>
    %c0_39 = arith.constant 0 : index
    %c0_40 = arith.constant 0 : index
    %112 = vector.load %arg3[%c0_39, %c0_40] : memref<128x384xf32, #tpu.memory_space<vmem>>, vector<128x384xf32>
    %cst_41 = arith.constant dense<0.000000e+00> : vector<8x384xf32>
    %113 = tpu.matmul %108, %112, %cst_41 {dimension_numbers = #tpu.dot_dimension_numbers<[1], [0], [0], [1], [0, 0, 1, 1], [], []>} : vector<8x128xf32>, vector<128x384xf32>, vector<8x384xf32> -> vector<8x384xf32>
    %114 = arith.addf %113, %5 : vector<8x384xf32>
    %115 = vector.extract_strided_slice %111 {offsets = [0, 0], sizes = [8, 128], strides = [1, 1]} : vector<8x384xf32> to vector<8x128xf32>
    %116 = vector.extract_strided_slice %114 {offsets = [0, 0], sizes = [8, 128], strides = [1, 1]} : vector<8x384xf32> to vector<8x128xf32>
    %117 = arith.addf %115, %116 : vector<8x128xf32>
    %cst_42 = arith.constant 0.000000e+00 : f32
    %118 = vector.broadcast %cst_42 : f32 to vector<8x128xf32>
    %119 = arith.subf %118, %117 : vector<8x128xf32>
    %120 = math.exp %119 : vector<8x128xf32>
    %cst_43 = arith.constant 1.000000e+00 : f32
    %121 = vector.broadcast %cst_43 : f32 to vector<8x128xf32>
    %122 = arith.addf %121, %120 : vector<8x128xf32>
    %cst_44 = arith.constant 1.000000e+00 : f32
    %123 = vector.broadcast %cst_44 : f32 to vector<8x128xf32>
    %124 = arith.divf %123, %122 : vector<8x128xf32>
    %125 = vector.extract_strided_slice %111 {offsets = [0, 128], sizes = [8, 128], strides = [1, 1]} : vector<8x384xf32> to vector<8x128xf32>
    %126 = vector.extract_strided_slice %114 {offsets = [0, 128], sizes = [8, 128], strides = [1, 1]} : vector<8x384xf32> to vector<8x128xf32>
    %127 = arith.addf %125, %126 : vector<8x128xf32>
    %cst_45 = arith.constant 0.000000e+00 : f32
    %128 = vector.broadcast %cst_45 : f32 to vector<8x128xf32>
    %129 = arith.subf %128, %127 : vector<8x128xf32>
    %130 = math.exp %129 : vector<8x128xf32>
    %cst_46 = arith.constant 1.000000e+00 : f32
    %131 = vector.broadcast %cst_46 : f32 to vector<8x128xf32>
    %132 = arith.addf %131, %130 : vector<8x128xf32>
    %cst_47 = arith.constant 1.000000e+00 : f32
    %133 = vector.broadcast %cst_47 : f32 to vector<8x128xf32>
    %134 = arith.divf %133, %132 : vector<8x128xf32>
    %135 = vector.extract_strided_slice %111 {offsets = [0, 256], sizes = [8, 128], strides = [1, 1]} : vector<8x384xf32> to vector<8x128xf32>
    %136 = vector.extract_strided_slice %114 {offsets = [0, 256], sizes = [8, 128], strides = [1, 1]} : vector<8x384xf32> to vector<8x128xf32>
    %137 = arith.mulf %124, %136 : vector<8x128xf32>
    %138 = arith.addf %135, %137 : vector<8x128xf32>
    %139 = math.tanh %138 : vector<8x128xf32>
    %140 = arith.subf %108, %139 : vector<8x128xf32>
    %141 = arith.mulf %134, %140 : vector<8x128xf32>
    %142 = arith.addf %139, %141 : vector<8x128xf32>
    %c4_i32 = arith.constant 4 : i32
    %143 = arith.index_cast %c4_i32 : i32 to index
    %c0_48 = arith.constant 0 : index
    %c0_49 = arith.constant 0 : index
    %144 = vector.load %arg2[%143, %c0_48, %c0_49] : memref<8x8x384xf32, #tpu.memory_space<vmem>>, vector<1x8x384xf32>
    %145 = vector.shape_cast %144 : vector<1x8x384xf32> to vector<8x384xf32>
    %c0_50 = arith.constant 0 : index
    %c0_51 = arith.constant 0 : index
    %146 = vector.load %arg3[%c0_50, %c0_51] : memref<128x384xf32, #tpu.memory_space<vmem>>, vector<128x384xf32>
    %cst_52 = arith.constant dense<0.000000e+00> : vector<8x384xf32>
    %147 = tpu.matmul %142, %146, %cst_52 {dimension_numbers = #tpu.dot_dimension_numbers<[1], [0], [0], [1], [0, 0, 1, 1], [], []>} : vector<8x128xf32>, vector<128x384xf32>, vector<8x384xf32> -> vector<8x384xf32>
    %148 = arith.addf %147, %5 : vector<8x384xf32>
    %149 = vector.extract_strided_slice %145 {offsets = [0, 0], sizes = [8, 128], strides = [1, 1]} : vector<8x384xf32> to vector<8x128xf32>
    %150 = vector.extract_strided_slice %148 {offsets = [0, 0], sizes = [8, 128], strides = [1, 1]} : vector<8x384xf32> to vector<8x128xf32>
    %151 = arith.addf %149, %150 : vector<8x128xf32>
    %cst_53 = arith.constant 0.000000e+00 : f32
    %152 = vector.broadcast %cst_53 : f32 to vector<8x128xf32>
    %153 = arith.subf %152, %151 : vector<8x128xf32>
    %154 = math.exp %153 : vector<8x128xf32>
    %cst_54 = arith.constant 1.000000e+00 : f32
    %155 = vector.broadcast %cst_54 : f32 to vector<8x128xf32>
    %156 = arith.addf %155, %154 : vector<8x128xf32>
    %cst_55 = arith.constant 1.000000e+00 : f32
    %157 = vector.broadcast %cst_55 : f32 to vector<8x128xf32>
    %158 = arith.divf %157, %156 : vector<8x128xf32>
    %159 = vector.extract_strided_slice %145 {offsets = [0, 128], sizes = [8, 128], strides = [1, 1]} : vector<8x384xf32> to vector<8x128xf32>
    %160 = vector.extract_strided_slice %148 {offsets = [0, 128], sizes = [8, 128], strides = [1, 1]} : vector<8x384xf32> to vector<8x128xf32>
    %161 = arith.addf %159, %160 : vector<8x128xf32>
    %cst_56 = arith.constant 0.000000e+00 : f32
    %162 = vector.broadcast %cst_56 : f32 to vector<8x128xf32>
    %163 = arith.subf %162, %161 : vector<8x128xf32>
    %164 = math.exp %163 : vector<8x128xf32>
    %cst_57 = arith.constant 1.000000e+00 : f32
    %165 = vector.broadcast %cst_57 : f32 to vector<8x128xf32>
    %166 = arith.addf %165, %164 : vector<8x128xf32>
    %cst_58 = arith.constant 1.000000e+00 : f32
    %167 = vector.broadcast %cst_58 : f32 to vector<8x128xf32>
    %168 = arith.divf %167, %166 : vector<8x128xf32>
    %169 = vector.extract_strided_slice %145 {offsets = [0, 256], sizes = [8, 128], strides = [1, 1]} : vector<8x384xf32> to vector<8x128xf32>
    %170 = vector.extract_strided_slice %148 {offsets = [0, 256], sizes = [8, 128], strides = [1, 1]} : vector<8x384xf32> to vector<8x128xf32>
    %171 = arith.mulf %158, %170 : vector<8x128xf32>
    %172 = arith.addf %169, %171 : vector<8x128xf32>
    %173 = math.tanh %172 : vector<8x128xf32>
    %174 = arith.subf %142, %173 : vector<8x128xf32>
    %175 = arith.mulf %168, %174 : vector<8x128xf32>
    %176 = arith.addf %173, %175 : vector<8x128xf32>
    %c5_i32 = arith.constant 5 : i32
    %177 = arith.index_cast %c5_i32 : i32 to index
    %c0_59 = arith.constant 0 : index
    %c0_60 = arith.constant 0 : index
    %178 = vector.load %arg2[%177, %c0_59, %c0_60] : memref<8x8x384xf32, #tpu.memory_space<vmem>>, vector<1x8x384xf32>
    %179 = vector.shape_cast %178 : vector<1x8x384xf32> to vector<8x384xf32>
    %c0_61 = arith.constant 0 : index
    %c0_62 = arith.constant 0 : index
    %180 = vector.load %arg3[%c0_61, %c0_62] : memref<128x384xf32, #tpu.memory_space<vmem>>, vector<128x384xf32>
    %cst_63 = arith.constant dense<0.000000e+00> : vector<8x384xf32>
    %181 = tpu.matmul %176, %180, %cst_63 {dimension_numbers = #tpu.dot_dimension_numbers<[1], [0], [0], [1], [0, 0, 1, 1], [], []>} : vector<8x128xf32>, vector<128x384xf32>, vector<8x384xf32> -> vector<8x384xf32>
    %182 = arith.addf %181, %5 : vector<8x384xf32>
    %183 = vector.extract_strided_slice %179 {offsets = [0, 0], sizes = [8, 128], strides = [1, 1]} : vector<8x384xf32> to vector<8x128xf32>
    %184 = vector.extract_strided_slice %182 {offsets = [0, 0], sizes = [8, 128], strides = [1, 1]} : vector<8x384xf32> to vector<8x128xf32>
    %185 = arith.addf %183, %184 : vector<8x128xf32>
    %cst_64 = arith.constant 0.000000e+00 : f32
    %186 = vector.broadcast %cst_64 : f32 to vector<8x128xf32>
    %187 = arith.subf %186, %185 : vector<8x128xf32>
    %188 = math.exp %187 : vector<8x128xf32>
    %cst_65 = arith.constant 1.000000e+00 : f32
    %189 = vector.broadcast %cst_65 : f32 to vector<8x128xf32>
    %190 = arith.addf %189, %188 : vector<8x128xf32>
    %cst_66 = arith.constant 1.000000e+00 : f32
    %191 = vector.broadcast %cst_66 : f32 to vector<8x128xf32>
    %192 = arith.divf %191, %190 : vector<8x128xf32>
    %193 = vector.extract_strided_slice %179 {offsets = [0, 128], sizes = [8, 128], strides = [1, 1]} : vector<8x384xf32> to vector<8x128xf32>
    %194 = vector.extract_strided_slice %182 {offsets = [0, 128], sizes = [8, 128], strides = [1, 1]} : vector<8x384xf32> to vector<8x128xf32>
    %195 = arith.addf %193, %194 : vector<8x128xf32>
    %cst_67 = arith.constant 0.000000e+00 : f32
    %196 = vector.broadcast %cst_67 : f32 to vector<8x128xf32>
    %197 = arith.subf %196, %195 : vector<8x128xf32>
    %198 = math.exp %197 : vector<8x128xf32>
    %cst_68 = arith.constant 1.000000e+00 : f32
    %199 = vector.broadcast %cst_68 : f32 to vector<8x128xf32>
    %200 = arith.addf %199, %198 : vector<8x128xf32>
    %cst_69 = arith.constant 1.000000e+00 : f32
    %201 = vector.broadcast %cst_69 : f32 to vector<8x128xf32>
    %202 = arith.divf %201, %200 : vector<8x128xf32>
    %203 = vector.extract_strided_slice %179 {offsets = [0, 256], sizes = [8, 128], strides = [1, 1]} : vector<8x384xf32> to vector<8x128xf32>
    %204 = vector.extract_strided_slice %182 {offsets = [0, 256], sizes = [8, 128], strides = [1, 1]} : vector<8x384xf32> to vector<8x128xf32>
    %205 = arith.mulf %192, %204 : vector<8x128xf32>
    %206 = arith.addf %203, %205 : vector<8x128xf32>
    %207 = math.tanh %206 : vector<8x128xf32>
    %208 = arith.subf %176, %207 : vector<8x128xf32>
    %209 = arith.mulf %202, %208 : vector<8x128xf32>
    %210 = arith.addf %207, %209 : vector<8x128xf32>
    %c6_i32 = arith.constant 6 : i32
    %211 = arith.index_cast %c6_i32 : i32 to index
    %c0_70 = arith.constant 0 : index
    %c0_71 = arith.constant 0 : index
    %212 = vector.load %arg2[%211, %c0_70, %c0_71] : memref<8x8x384xf32, #tpu.memory_space<vmem>>, vector<1x8x384xf32>
    %213 = vector.shape_cast %212 : vector<1x8x384xf32> to vector<8x384xf32>
    %c0_72 = arith.constant 0 : index
    %c0_73 = arith.constant 0 : index
    %214 = vector.load %arg3[%c0_72, %c0_73] : memref<128x384xf32, #tpu.memory_space<vmem>>, vector<128x384xf32>
    %cst_74 = arith.constant dense<0.000000e+00> : vector<8x384xf32>
    %215 = tpu.matmul %210, %214, %cst_74 {dimension_numbers = #tpu.dot_dimension_numbers<[1], [0], [0], [1], [0, 0, 1, 1], [], []>} : vector<8x128xf32>, vector<128x384xf32>, vector<8x384xf32> -> vector<8x384xf32>
    %216 = arith.addf %215, %5 : vector<8x384xf32>
    %217 = vector.extract_strided_slice %213 {offsets = [0, 0], sizes = [8, 128], strides = [1, 1]} : vector<8x384xf32> to vector<8x128xf32>
    %218 = vector.extract_strided_slice %216 {offsets = [0, 0], sizes = [8, 128], strides = [1, 1]} : vector<8x384xf32> to vector<8x128xf32>
    %219 = arith.addf %217, %218 : vector<8x128xf32>
    %cst_75 = arith.constant 0.000000e+00 : f32
    %220 = vector.broadcast %cst_75 : f32 to vector<8x128xf32>
    %221 = arith.subf %220, %219 : vector<8x128xf32>
    %222 = math.exp %221 : vector<8x128xf32>
    %cst_76 = arith.constant 1.000000e+00 : f32
    %223 = vector.broadcast %cst_76 : f32 to vector<8x128xf32>
    %224 = arith.addf %223, %222 : vector<8x128xf32>
    %cst_77 = arith.constant 1.000000e+00 : f32
    %225 = vector.broadcast %cst_77 : f32 to vector<8x128xf32>
    %226 = arith.divf %225, %224 : vector<8x128xf32>
    %227 = vector.extract_strided_slice %213 {offsets = [0, 128], sizes = [8, 128], strides = [1, 1]} : vector<8x384xf32> to vector<8x128xf32>
    %228 = vector.extract_strided_slice %216 {offsets = [0, 128], sizes = [8, 128], strides = [1, 1]} : vector<8x384xf32> to vector<8x128xf32>
    %229 = arith.addf %227, %228 : vector<8x128xf32>
    %cst_78 = arith.constant 0.000000e+00 : f32
    %230 = vector.broadcast %cst_78 : f32 to vector<8x128xf32>
    %231 = arith.subf %230, %229 : vector<8x128xf32>
    %232 = math.exp %231 : vector<8x128xf32>
    %cst_79 = arith.constant 1.000000e+00 : f32
    %233 = vector.broadcast %cst_79 : f32 to vector<8x128xf32>
    %234 = arith.addf %233, %232 : vector<8x128xf32>
    %cst_80 = arith.constant 1.000000e+00 : f32
    %235 = vector.broadcast %cst_80 : f32 to vector<8x128xf32>
    %236 = arith.divf %235, %234 : vector<8x128xf32>
    %237 = vector.extract_strided_slice %213 {offsets = [0, 256], sizes = [8, 128], strides = [1, 1]} : vector<8x384xf32> to vector<8x128xf32>
    %238 = vector.extract_strided_slice %216 {offsets = [0, 256], sizes = [8, 128], strides = [1, 1]} : vector<8x384xf32> to vector<8x128xf32>
    %239 = arith.mulf %226, %238 : vector<8x128xf32>
    %240 = arith.addf %237, %239 : vector<8x128xf32>
    %241 = math.tanh %240 : vector<8x128xf32>
    %242 = arith.subf %210, %241 : vector<8x128xf32>
    %243 = arith.mulf %236, %242 : vector<8x128xf32>
    %244 = arith.addf %241, %243 : vector<8x128xf32>
    %c7_i32 = arith.constant 7 : i32
    %245 = arith.index_cast %c7_i32 : i32 to index
    %c0_81 = arith.constant 0 : index
    %c0_82 = arith.constant 0 : index
    %246 = vector.load %arg2[%245, %c0_81, %c0_82] : memref<8x8x384xf32, #tpu.memory_space<vmem>>, vector<1x8x384xf32>
    %247 = vector.shape_cast %246 : vector<1x8x384xf32> to vector<8x384xf32>
    %c0_83 = arith.constant 0 : index
    %c0_84 = arith.constant 0 : index
    %248 = vector.load %arg3[%c0_83, %c0_84] : memref<128x384xf32, #tpu.memory_space<vmem>>, vector<128x384xf32>
    %cst_85 = arith.constant dense<0.000000e+00> : vector<8x384xf32>
    %249 = tpu.matmul %244, %248, %cst_85 {dimension_numbers = #tpu.dot_dimension_numbers<[1], [0], [0], [1], [0, 0, 1, 1], [], []>} : vector<8x128xf32>, vector<128x384xf32>, vector<8x384xf32> -> vector<8x384xf32>
    %250 = arith.addf %249, %5 : vector<8x384xf32>
    %251 = vector.extract_strided_slice %247 {offsets = [0, 0], sizes = [8, 128], strides = [1, 1]} : vector<8x384xf32> to vector<8x128xf32>
    %252 = vector.extract_strided_slice %250 {offsets = [0, 0], sizes = [8, 128], strides = [1, 1]} : vector<8x384xf32> to vector<8x128xf32>
    %253 = arith.addf %251, %252 : vector<8x128xf32>
    %cst_86 = arith.constant 0.000000e+00 : f32
    %254 = vector.broadcast %cst_86 : f32 to vector<8x128xf32>
    %255 = arith.subf %254, %253 : vector<8x128xf32>
    %256 = math.exp %255 : vector<8x128xf32>
    %cst_87 = arith.constant 1.000000e+00 : f32
    %257 = vector.broadcast %cst_87 : f32 to vector<8x128xf32>
    %258 = arith.addf %257, %256 : vector<8x128xf32>
    %cst_88 = arith.constant 1.000000e+00 : f32
    %259 = vector.broadcast %cst_88 : f32 to vector<8x128xf32>
    %260 = arith.divf %259, %258 : vector<8x128xf32>
    %261 = vector.extract_strided_slice %247 {offsets = [0, 128], sizes = [8, 128], strides = [1, 1]} : vector<8x384xf32> to vector<8x128xf32>
    %262 = vector.extract_strided_slice %250 {offsets = [0, 128], sizes = [8, 128], strides = [1, 1]} : vector<8x384xf32> to vector<8x128xf32>
    %263 = arith.addf %261, %262 : vector<8x128xf32>
    %cst_89 = arith.constant 0.000000e+00 : f32
    %264 = vector.broadcast %cst_89 : f32 to vector<8x128xf32>
    %265 = arith.subf %264, %263 : vector<8x128xf32>
    %266 = math.exp %265 : vector<8x128xf32>
    %cst_90 = arith.constant 1.000000e+00 : f32
    %267 = vector.broadcast %cst_90 : f32 to vector<8x128xf32>
    %268 = arith.addf %267, %266 : vector<8x128xf32>
    %cst_91 = arith.constant 1.000000e+00 : f32
    %269 = vector.broadcast %cst_91 : f32 to vector<8x128xf32>
    %270 = arith.divf %269, %268 : vector<8x128xf32>
    %271 = vector.extract_strided_slice %247 {offsets = [0, 256], sizes = [8, 128], strides = [1, 1]} : vector<8x384xf32> to vector<8x128xf32>
    %272 = vector.extract_strided_slice %250 {offsets = [0, 256], sizes = [8, 128], strides = [1, 1]} : vector<8x384xf32> to vector<8x128xf32>
    %273 = arith.mulf %260, %272 : vector<8x128xf32>
    %274 = arith.addf %271, %273 : vector<8x128xf32>
    %275 = math.tanh %274 : vector<8x128xf32>
    %276 = arith.subf %244, %275 : vector<8x128xf32>
    %277 = arith.mulf %270, %276 : vector<8x128xf32>
    %278 = arith.addf %275, %277 : vector<8x128xf32>
    %c8_i32 = arith.constant 8 : i32
    %c0_92 = arith.constant 0 : index
    %c0_93 = arith.constant 0 : index
    %279 = vector.load %arg8[%c0_92, %c0_93] : memref<8x128xf32, #tpu.memory_space<vmem>>, vector<8x128xf32>
    tpu.vector_store %arg8[%c0_92, %c0_93], %278 {strides = array<i32>} : memref<8x128xf32, #tpu.memory_space<vmem>>, vector<8x128xf32>,
    %c0_i32_94 = arith.constant 0 : i32
    %280 = arith.cmpi eq, %arg1, %c0_i32_94 : i32
    %281 = arith.extui %280 : i1 to i32
    %c0_i32_95 = arith.constant 0 : i32
    %282 = arith.cmpi ne, %281, %c0_i32_95 : i32
    scf.if %282 {
      %c0_96 = arith.constant 0 : index
      %c0_97 = arith.constant 0 : index
      %283 = vector.load %arg5[%c0_96, %c0_97] : memref<128x128xf32, #tpu.memory_space<vmem>>, vector<128x128xf32>
      %cst_98 = arith.constant dense<0.000000e+00> : vector<8x128xf32>
      %284 = tpu.matmul %278, %283, %cst_98 {dimension_numbers = #tpu.dot_dimension_numbers<[1], [0], [0], [1], [0, 0, 1, 1], [], []>} : vector<8x128xf32>, vector<128x128xf32>, vector<8x128xf32> -> vector<8x128xf32>
      %c0_99 = arith.constant 0 : index
      %c0_100 = arith.constant 0 : index
      %285 = vector.load %arg6[%c0_99, %c0_100] : memref<1x128xf32, #tpu.memory_space<vmem>>, vector<1x128xf32>
      %286 = vector.broadcast %285 : vector<1x128xf32> to vector<8x128xf32>
      %287 = arith.addf %284, %286 : vector<8x128xf32>
      %c0_101 = arith.constant 0 : index
      %c0_102 = arith.constant 0 : index
      %288 = vector.load %arg7[%c0_101, %c0_102] : memref<8x128xf32, #tpu.memory_space<vmem>>, vector<8x128xf32>
      tpu.vector_store %arg7[%c0_101, %c0_102], %287 {strides = array<i32>} : memref<8x128xf32, #tpu.memory_space<vmem>>, vector<8x128xf32>,
    } else {
    }
    return
  }
  func.func @transform_0(%arg0: i32, %arg1: i32) -> (i32, i32, i32) {
    %c0_i32 = arith.constant 0 : i32
    %c0_i32_0 = arith.constant 0 : i32
    return %arg1, %arg0, %c0_i32 : i32, i32, i32
  }
  func.func @transform_1(%arg0: i32, %arg1: i32) -> (i32, i32) {
    %c0_i32 = arith.constant 0 : i32
    %c0_i32_0 = arith.constant 0 : i32
    %c0_i32_1 = arith.constant 0 : i32
    return %c0_i32, %c0_i32_0 : i32, i32
  }
  func.func @transform_2(%arg0: i32, %arg1: i32) -> (i32, i32) {
    %c0_i32 = arith.constant 0 : i32
    %c0_i32_0 = arith.constant 0 : i32
    %c0_i32_1 = arith.constant 0 : i32
    return %c0_i32, %c0_i32_0 : i32, i32
  }
  func.func @transform_3(%arg0: i32, %arg1: i32) -> (i32, i32) {
    %c0_i32 = arith.constant 0 : i32
    %c0_i32_0 = arith.constant 0 : i32
    %c0_i32_1 = arith.constant 0 : i32
    return %c0_i32, %c0_i32_0 : i32, i32
  }
  func.func @transform_4(%arg0: i32, %arg1: i32) -> (i32, i32) {
    %c0_i32 = arith.constant 0 : i32
    %c0_i32_0 = arith.constant 0 : i32
    %c0_i32_1 = arith.constant 0 : i32
    return %c0_i32, %c0_i32_0 : i32, i32
  }
  func.func @transform_5(%arg0: i32, %arg1: i32) -> (i32, i32) {
    %c0_i32 = arith.constant 0 : i32
    %c0_i32_0 = arith.constant 0 : i32
    return %arg0, %c0_i32 : i32, i32
  }
}

</mosaic_0001>

<llo_original>
// kernel: encoder_forward.1
$region0: #{encoder_forward.1}
  #allocation0 [shape = 'u32[]', space=smem, size = 0x4, offset = 0x4, fixed_abs, tag = 'smem constant byte address 0x4 - core index']
  #allocation1 [shape = 'u32[144,128]{1,0:T(1,128)}', space=vmem, size = 0x12000, scoped, tag = 'internal scratch']
  #allocation2 [shape = 'f32[8,128]{1,0:T(8,128)}', space=vmem, size = 0x1000, scoped, tag = 'scratch operand']
  %s0 = inlined_call_operand.vmem [shape: f32[8,8,384], index: 0, kind: input, shape index: {}]
  %s1 = inlined_call_operand.vmem [shape: f32[128,384], index: 1, kind: input, shape index: {}]
  %s2 = inlined_call_operand.vmem [shape: f32[1,384], index: 2, kind: input, shape index: {}]
  %s3 = inlined_call_operand.vmem [shape: f32[128,128], index: 3, kind: input, shape index: {}]
  %s4 = inlined_call_operand.vmem [shape: f32[1,128], index: 4, kind: input, shape index: {}]
  %s5 = inlined_call_operand.vmem [shape: f32[8,128], index: 5, kind: output, shape index: {}]
  %s6 = sld [smem:[#allocation0]]
  $region38: #{encoder_forward.1} parent=0
    _
  %s8 = ssub.s32 1, %s6
  %s9 = scalar_select 0, %s8, %s6
  // Predicated region
  $region2: #{encoder_forward.1} parent=0 // pred_check
    _
  $region3: #{encoder_forward.1} parent=0 // pred_check_branch
    %11 = sbr.rel (0) target = $region5
  $region4: #{encoder_forward.1} parent=0 // pred_region
    _
  $region5: #{encoder_forward.1} parent=0 // pred_fallthru
    _
  // Predicated region
  $region6: #{encoder_forward.1} parent=0 // pred_check
    _
  $region7: #{encoder_forward.1} parent=0 // pred_check_branch
    %13 = sbr.rel (0) target = $region9
  $region8: #{encoder_forward.1} parent=0 // pred_region
    _
  $region9: #{encoder_forward.1} parent=0 // pred_fallthru
    _
  // Predicated region
  $region10: #{encoder_forward.1} parent=0 // pred_check
    _
  $region11: #{encoder_forward.1} parent=0 // pred_check_branch
    %15 = sbr.rel (0) target = $region13
  $region12: #{encoder_forward.1} parent=0 // pred_region
    _
  $region13: #{encoder_forward.1} parent=0 // pred_fallthru
    _
  // Predicated region
  $region14: #{encoder_forward.1} parent=0 // pred_check
    _
  $region15: #{encoder_forward.1} parent=0 // pred_check_branch
    %17 = sbr.rel (0) target = $region17
  $region16: #{encoder_forward.1} parent=0 // pred_region
    _
  $region17: #{encoder_forward.1} parent=0 // pred_fallthru
    _
  // Predicated region
  $region18: #{encoder_forward.1} parent=0 // pred_check
    _
  $region19: #{encoder_forward.1} parent=0 // pred_check_branch
    %19 = sbr.rel (0) target = $region21
  $region20: #{encoder_forward.1} parent=0 // pred_region
    _
  $region21: #{encoder_forward.1} parent=0 // pred_fallthru
    _
  %p20 = scmp.eq.s32.totalorder 0, 0
  // Predicated region
  $region22: #{encoder_forward.1} parent=0 // pred_check
    %p21 = pneg %p20
  $region23: #{encoder_forward.1} parent=0 // pred_check_branch
    %23 = sbr.rel (%p21) target = $region25
  $region24: #{encoder_forward.1} parent=0 // pred_region
    %24 = vst [vmem:[#allocation2] sm:$0xff] 0.0
  $region25: #{encoder_forward.1} parent=0 // pred_fallthru
    _
  %v25 = vld [vmem:[%s2] sm:$0x7]
  %v27 = vlaneseq
  %v28 = vshrl.u32 %v27, 7
  %v29 = vsub.s32 0, %v28
  %v30 = vrot.slane %v25, %v29
  %v31 = vlaneseq
  %v32 = vshrl.u32 %v31, 7
  %v33 = vsub.s32 1, %v32
  %v34 = vrot.slane %v25, %v33
  %v35 = vlaneseq
  %v36 = vshrl.u32 %v35, 7
  %v37 = vsub.s32 2, %v36
  %v38 = vrot.slane %v25, %v37
  %v42 = vld [vmem:[#allocation2] sm:$0xff]
  %v43 = vld [vmem:[%s0] sm:$0xff]
  %v44 = vld [vmem:[%s0 + $0x8] sm:$0xff]
  %v45 = vld [vmem:[%s0 + $0x10] sm:$0xff]
  %v46 = vld [vmem:[%s1] sm:$0xff]
  %v47 = vld [vmem:[%s1 + $0x8] sm:$0xff]
  %v48 = vld [vmem:[%s1 + $0x10] sm:$0xff]
  %v49 = vld [vmem:[%s1 + $0x18] sm:$0xff]
  %v50 = vld [vmem:[%s1 + $0x20] sm:$0xff]
  %v51 = vld [vmem:[%s1 + $0x28] sm:$0xff]
  %v52 = vld [vmem:[%s1 + $0x30] sm:$0xff]
  %v53 = vld [vmem:[%s1 + $0x38] sm:$0xff]
  %v54 = vld [vmem:[%s1 + $0x40] sm:$0xff]
  %v55 = vld [vmem:[%s1 + $0x48] sm:$0xff]
  %v56 = vld [vmem:[%s1 + $0x50] sm:$0xff]
  %v57 = vld [vmem:[%s1 + $0x58] sm:$0xff]
  %v58 = vld [vmem:[%s1 + $0x60] sm:$0xff]
  %v59 = vld [vmem:[%s1 + $0x68] sm:$0xff]
  %v60 = vld [vmem:[%s1 + $0x70] sm:$0xff]
  %v61 = vld [vmem:[%s1 + $0x78] sm:$0xff]
  %v62 = vld [vmem:[%s1 + $0x80] sm:$0xff]
  %v63 = vld [vmem:[%s1 + $0x88] sm:$0xff]
  %v64 = vld [vmem:[%s1 + $0x90] sm:$0xff]
  %v65 = vld [vmem:[%s1 + $0x98] sm:$0xff]
  %v66 = vld [vmem:[%s1 + $0xa0] sm:$0xff]
  %v67 = vld [vmem:[%s1 + $0xa8] sm:$0xff]
  %v68 = vld [vmem:[%s1 + $0xb0] sm:$0xff]
  %v69 = vld [vmem:[%s1 + $0xb8] sm:$0xff]
  %v70 = vld [vmem:[%s1 + $0xc0] sm:$0xff]
  %v71 = vld [vmem:[%s1 + $0xc8] sm:$0xff]
  %v72 = vld [vmem:[%s1 + $0xd0] sm:$0xff]
  %v73 = vld [vmem:[%s1 + $0xd8] sm:$0xff]
  %v74 = vld [vmem:[%s1 + $0xe0] sm:$0xff]
  %v75 = vld [vmem:[%s1 + $0xe8] sm:$0xff]
  %v76 = vld [vmem:[%s1 + $0xf0] sm:$0xff]
  %v77 = vld [vmem:[%s1 + $0xf8] sm:$0xff]
  %v78 = vld [vmem:[%s1 + $0x100] sm:$0xff]
  %v79 = vld [vmem:[%s1 + $0x108] sm:$0xff]
  %v80 = vld [vmem:[%s1 + $0x110] sm:$0xff]
  %v81 = vld [vmem:[%s1 + $0x118] sm:$0xff]
  %v82 = vld [vmem:[%s1 + $0x120] sm:$0xff]
  %v83 = vld [vmem:[%s1 + $0x128] sm:$0xff]
  %v84 = vld [vmem:[%s1 + $0x130] sm:$0xff]
  %v85 = vld [vmem:[%s1 + $0x138] sm:$0xff]
  %v86 = vld [vmem:[%s1 + $0x140] sm:$0xff]
  %v87 = vld [vmem:[%s1 + $0x148] sm:$0xff]
  %v88 = vld [vmem:[%s1 + $0x150] sm:$0xff]
  %v89 = vld [vmem:[%s1 + $0x158] sm:$0xff]
  %v90 = vld [vmem:[%s1 + $0x160] sm:$0xff]
  %v91 = vld [vmem:[%s1 + $0x168] sm:$0xff]
  %v92 = vld [vmem:[%s1 + $0x170] sm:$0xff]
  %v93 = vld [vmem:[%s1 + $0x178] sm:$0xff]
  %94 = vmatprep.subr.mxu0 %v47
  %95 = vmatpush1.msra.mxu0 %v46
  %96 = vmatprep.subr.mxu0 %v50
  %97 = vmatpush1.msra.mxu0 %v49
  %98 = vmatprep.subr.mxu0 %v53
  %99 = vmatpush1.msra.mxu0 %v52
  %100 = vmatprep.subr.mxu0 %v56
  %101 = vmatpush1.msra.mxu0 %v55
  %102 = vmatprep.subr.mxu0 %v59
  %103 = vmatpush1.msra.mxu0 %v58
  %104 = vmatprep.subr.mxu0 %v62
  %105 = vmatpush1.msra.mxu0 %v61
  %106 = vmatprep.subr.mxu0 %v65
  %107 = vmatpush1.msra.mxu0 %v64
  %108 = vmatprep.subr.mxu0 %v68
  %109 = vmatpush1.msra.mxu0 %v67
  %110 = vmatprep.subr.mxu0 %v71
  %111 = vmatpush1.msra.mxu0 %v70
  %112 = vmatprep.subr.mxu0 %v74
  %113 = vmatpush1.msra.mxu0 %v73
  %114 = vmatprep.subr.mxu0 %v77
  %115 = vmatpush1.msra.mxu0 %v76
  %116 = vmatprep.subr.mxu0 %v80
  %117 = vmatpush1.msra.mxu0 %v79
  %118 = vmatprep.subr.mxu0 %v83
  %119 = vmatpush1.msra.mxu0 %v82
  %120 = vmatprep.subr.mxu0 %v86
  %121 = vmatpush1.msra.mxu0 %v85
  %122 = vmatprep.subr.mxu0 %v89
  %123 = vmatpush1.msra.mxu0 %v88
  %124 = vmatprep.subr.mxu0 %v92
  %125 = vmatpush1.msra.mxu0 %v91
  %126 = vmatprep.subr.mxu0 0.0
  %127 = vmatpush1.msra.mxu0 0.0
  %128 = vmatprep.subr.mxu0 0.0
  %129 = vmatpush1.msra.mxu0 0.0
  %130 = vmatprep.subr.mxu0 0.0
  %131 = vmatpush1.msra.mxu0 0.0
  %132 = vmatprep.subr.mxu0 0.0
  %133 = vmatpush1.msra.mxu0 0.0
  %134 = vmatprep.subr.mxu0 0.0
  %135 = vmatpush1.msra.mxu0 0.0
  %136 = vmatprep.subr.mxu0 0.0
  %137 = vmatpush1.msra.mxu0 0.0
  %138 = vmatprep.subr.mxu0 0.0
  %139 = vmatpush1.msra.mxu0 0.0
  %140 = vmatprep.subr.mxu0 0.0
  %141 = vmatpush1.msra.mxu0 0.0
  %142 = vmatprep.subr.mxu0 0.0
  %143 = vmatpush1.msra.mxu0 0.0
  %144 = vmatprep.subr.mxu0 0.0
  %145 = vmatpush1.msra.mxu0 0.0
  %146 = vmatprep.subr.mxu0 0.0
  %147 = vmatpush1.msra.mxu0 0.0
  %148 = vmatprep.subr.mxu0 0.0
  %149 = vmatpush1.msra.mxu0 0.0
  %150 = vmatprep.subr.mxu0 0.0
  %151 = vmatpush1.msra.mxu0 0.0
  %152 = vmatprep.subr.mxu0 0.0
  %153 = vmatpush1.msra.mxu0 0.0
  %154 = vmatprep.subr.mxu0 0.0
  %155 = vmatpush1.msra.mxu0 0.0
  %156 = vmatprep.subr.mxu0 0.0
  %157 = vmatpush1.msra.mxu0 0.0
  %158 = vmatprep.mubr.f32.mxu0 0.0
  %159 = vmatmul.mubr.f32.gmra.mrb[0].mxu0 %v42
  %v160 = vpop.f32.mrb[0].mxu0
  %v161 = vadd.f32 %v30, %v160
  %v162 = vpop.f32.mrb[0].mxu0
  %v163 = vadd.f32 %v34, %v162
  %164 = vdwg.mxu0
  %165 = vmatprep.subr.mxu0 0.0
  %166 = vmatpush1.msra.mxu0 %v48
  %167 = vmatprep.subr.mxu0 0.0
  %168 = vmatpush1.msra.mxu0 %v51
  %169 = vmatprep.subr.mxu0 0.0
  %170 = vmatpush1.msra.mxu0 %v54
  %171 = vmatprep.subr.mxu0 0.0
  %172 = vmatpush1.msra.mxu0 %v57
  %173 = vmatprep.subr.mxu0 0.0
  %174 = vmatpush1.msra.mxu0 %v60
  %175 = vmatprep.subr.mxu0 0.0
  %176 = vmatpush1.msra.mxu0 %v63
  %177 = vmatprep.subr.mxu0 0.0
  %178 = vmatpush1.msra.mxu0 %v66
  %179 = vmatprep.subr.mxu0 0.0
  %180 = vmatpush1.msra.mxu0 %v69
  %181 = vmatprep.subr.mxu0 0.0
  %182 = vmatpush1.msra.mxu0 %v72
  %183 = vmatprep.subr.mxu0 0.0
  %184 = vmatpush1.msra.mxu0 %v75
  %185 = vmatprep.subr.mxu0 0.0
  %186 = vmatpush1.msra.mxu0 %v78
  %187 = vmatprep.subr.mxu0 0.0
  %188 = vmatpush1.msra.mxu0 %v81
  %189 = vmatprep.subr.mxu0 0.0
  %190 = vmatpush1.msra.mxu0 %v84
  %191 = vmatprep.subr.mxu0 0.0
  %192 = vmatpush1.msra.mxu0 %v87
  %193 = vmatprep.subr.mxu0 0.0
  %194 = vmatpush1.msra.mxu0 %v90
  %195 = vmatprep.subr.mxu0 0.0
  %196 = vmatpush1.msra.mxu0 %v93
  %197 = vmatprep.subr.mxu0 0.0
  %198 = vmatpush1.msra.mxu0 0.0
  %199 = vmatprep.subr.mxu0 0.0
  %200 = vmatpush1.msra.mxu0 0.0
  %201 = vmatprep.subr.mxu0 0.0
  %202 = vmatpush1.msra.mxu0 0.0
  %203 = vmatprep.subr.mxu0 0.0
  %204 = vmatpush1.msra.mxu0 0.0
  %205 = vmatprep.subr.mxu0 0.0
  %206 = vmatpush1.msra.mxu0 0.0
  %207 = vmatprep.subr.mxu0 0.0
  %208 = vmatpush1.msra.mxu0 0.0
  %209 = vmatprep.subr.mxu0 0.0
  %210 = vmatpush1.msra.mxu0 0.0
  %211 = vmatprep.subr.mxu0 0.0
  %212 = vmatpush1.msra.mxu0 0.0
  %213 = vmatprep.subr.mxu0 0.0
  %214 = vmatpush1.msra.mxu0 0.0
  %215 = vmatprep.subr.mxu0 0.0
  %216 = vmatpush1.msra.mxu0 0.0
  %217 = vmatprep.subr.mxu0 0.0
  %218 = vmatpush1.msra.mxu0 0.0
  %219 = vmatprep.subr.mxu0 0.0
  %220 = vmatpush1.msra.mxu0 0.0
  %221 = vmatprep.subr.mxu0 0.0
  %222 = vmatpush1.msra.mxu0 0.0
  %223 = vmatprep.subr.mxu0 0.0
  %224 = vmatpush1.msra.mxu0 0.0
  %225 = vmatprep.subr.mxu0 0.0
  %226 = vmatpush1.msra.mxu0 0.0
  %227 = vmatprep.subr.mxu0 0.0
  %228 = vmatpush1.msra.mxu0 0.0
  %229 = vmatprep.mubr.f32.mxu0 0.0
  %230 = vmatmul.mubr.f32.gmra.mrb[0].mxu0 %v42
  %v231 = vpop.f32.mrb[0].mxu0
  %v232 = vadd.f32 %v38, %v231
  %v233 = vpop.f32.mrb[0].mxu0
  %234 = vdwg.mxu0
  %v235 = vadd.f32 %v43, %v161
  %v236 = vsub.f32 0.0, %v235
  %v237 = vmul.f32 %v236, 1.442695
  %v238 = vpow.pop %v237
  %v239 = vadd.f32 %v238, 1.0
  %v240 = vrcp.pop %v239
  %v241 = vmul.f32 1.0, %v240
  %v242 = vadd.f32 %v44, %v163
  %v243 = vsub.f32 0.0, %v242
  %v244 = vmul.f32 %v243, 1.442695
  %v245 = vpow.pop %v244
  %v246 = vadd.f32 %v245, 1.0
  %v247 = vrcp.pop %v246
  %v248 = vmul.f32 1.0, %v247
  %v249 = vmul.f32 %v241, %v232
  %v250 = vadd.f32 %v45, %v249
  %v251 = vtanh.pop %v250
  %v252 = vsub.f32 %v42, %v251
  %v253 = vmul.f32 %v248, %v252
  %v254 = vadd.f32 %v251, %v253
  %s255 = scalar_lea.vmem %s0, 24
  %v256 = vld [vmem:[%s255] sm:$0xff]
  %v257 = vld [vmem:[%s255 + $0x8] sm:$0xff]
  %v258 = vld [vmem:[%s255 + $0x10] sm:$0xff]
  %259 = vmatprep.subr.mxu0 %v47
  %260 = vmatpush1.msra.mxu0 %v46
  %261 = vmatprep.subr.mxu0 %v50
  %262 = vmatpush1.msra.mxu0 %v49
  %263 = vmatprep.subr.mxu0 %v53
  %264 = vmatpush1.msra.mxu0 %v52
  %265 = vmatprep.subr.mxu0 %v56
  %266 = vmatpush1.msra.mxu0 %v55
  %267 = vmatprep.subr.mxu0 %v59
  %268 = vmatpush1.msra.mxu0 %v58
  %269 = vmatprep.subr.mxu0 %v62
  %270 = vmatpush1.msra.mxu0 %v61
  %271 = vmatprep.subr.mxu0 %v65
  %272 = vmatpush1.msra.mxu0 %v64
  %273 = vmatprep.subr.mxu0 %v68
  %274 = vmatpush1.msra.mxu0 %v67
  %275 = vmatprep.subr.mxu0 %v71
  %276 = vmatpush1.msra.mxu0 %v70
  %277 = vmatprep.subr.mxu0 %v74
  %278 = vmatpush1.msra.mxu0 %v73
  %279 = vmatprep.subr.mxu0 %v77
  %280 = vmatpush1.msra.mxu0 %v76
  %281 = vmatprep.subr.mxu0 %v80
  %282 = vmatpush1.msra.mxu0 %v79
  %283 = vmatprep.subr.mxu0 %v83
  %284 = vmatpush1.msra.mxu0 %v82
  %285 = vmatprep.subr.mxu0 %v86
  %286 = vmatpush1.msra.mxu0 %v85
  %287 = vmatprep.subr.mxu0 %v89
  %288 = vmatpush1.msra.mxu0 %v88
  %289 = vmatprep.subr.mxu0 %v92
  %290 = vmatpush1.msra.mxu0 %v91
  %291 = vmatprep.subr.mxu0 0.0
  %292 = vmatpush1.msra.mxu0 0.0
  %293 = vmatprep.subr.mxu0 0.0
  %294 = vmatpush1.msra.mxu0 0.0
  %295 = vmatprep.subr.mxu0 0.0
  %296 = vmatpush1.msra.mxu0 0.0
  %297 = vmatprep.subr.mxu0 0.0
  %298 = vmatpush1.msra.mxu0 0.0
  %299 = vmatprep.subr.mxu0 0.0
  %300 = vmatpush1.msra.mxu0 0.0
  %301 = vmatprep.subr.mxu0 0.0
  %302 = vmatpush1.msra.mxu0 0.0
  %303 = vmatprep.subr.mxu0 0.0
  %304 = vmatpush1.msra.mxu0 0.0
  %305 = vmatprep.subr.mxu0 0.0
  %306 = vmatpush1.msra.mxu0 0.0
  %307 = vmatprep.subr.mxu0 0.0
  %308 = vmatpush1.msra.mxu0 0.0
  %309 = vmatprep.subr.mxu0 0.0
  %310 = vmatpush1.msra.mxu0 0.0
  %311 = vmatprep.subr.mxu0 0.0
  %312 = vmatpush1.msra.mxu0 0.0
  %313 = vmatprep.subr.mxu0 0.0
  %314 = vmatpush1.msra.mxu0 0.0
  %315 = vmatprep.subr.mxu0 0.0
  %316 = vmatpush1.msra.mxu0 0.0
  %317 = vmatprep.subr.mxu0 0.0
  %318 = vmatpush1.msra.mxu0 0.0
  %319 = vmatprep.subr.mxu0 0.0
  %320 = vmatpush1.msra.mxu0 0.0
  %321 = vmatprep.subr.mxu0 0.0
  %322 = vmatpush1.msra.mxu0 0.0
  %323 = vmatprep.mubr.f32.mxu0 0.0
  %324 = vmatmul.mubr.f32.gmra.mrb[0].mxu0 %v254
  %v325 = vpop.f32.mrb[0].mxu0
  %v326 = vadd.f32 %v30, %v325
  %v327 = vpop.f32.mrb[0].mxu0
  %v328 = vadd.f32 %v34, %v327
  %329 = vdwg.mxu0
  %330 = vmatprep.subr.mxu0 0.0
  %331 = vmatpush1.msra.mxu0 %v48
  %332 = vmatprep.subr.mxu0 0.0
  %333 = vmatpush1.msra.mxu0 %v51
  %334 = vmatprep.subr.mxu0 0.0
  %335 = vmatpush1.msra.mxu0 %v54
  %336 = vmatprep.subr.mxu0 0.0
  %337 = vmatpush1.msra.mxu0 %v57
  %338 = vmatprep.subr.mxu0 0.0
  %339 = vmatpush1.msra.mxu0 %v60
  %340 = vmatprep.subr.mxu0 0.0
  %341 = vmatpush1.msra.mxu0 %v63
  %342 = vmatprep.subr.mxu0 0.0
  %343 = vmatpush1.msra.mxu0 %v66
  %344 = vmatprep.subr.mxu0 0.0
  %345 = vmatpush1.msra.mxu0 %v69
  %346 = vmatprep.subr.mxu0 0.0
  %347 = vmatpush1.msra.mxu0 %v72
  %348 = vmatprep.subr.mxu0 0.0
  %349 = vmatpush1.msra.mxu0 %v75
  %350 = vmatprep.subr.mxu0 0.0
  %351 = vmatpush1.msra.mxu0 %v78
  %352 = vmatprep.subr.mxu0 0.0
  %353 = vmatpush1.msra.mxu0 %v81
  %354 = vmatprep.subr.mxu0 0.0
  %355 = vmatpush1.msra.mxu0 %v84
  %356 = vmatprep.subr.mxu0 0.0
  %357 = vmatpush1.msra.mxu0 %v87
  %358 = vmatprep.subr.mxu0 0.0
  %359 = vmatpush1.msra.mxu0 %v90
  %360 = vmatprep.subr.mxu0 0.0
  %361 = vmatpush1.msra.mxu0 %v93
  %362 = vmatprep.subr.mxu0 0.0
  %363 = vmatpush1.msra.mxu0 0.0
  %364 = vmatprep.subr.mxu0 0.0
  %365 = vmatpush1.msra.mxu0 0.0
  %366 = vmatprep.subr.mxu0 0.0
  %367 = vmatpush1.msra.mxu0 0.0
  %368 = vmatprep.subr.mxu0 0.0
  %369 = vmatpush1.msra.mxu0 0.0
  %370 = vmatprep.subr.mxu0 0.0
  %371 = vmatpush1.msra.mxu0 0.0
  %372 = vmatprep.subr.mxu0 0.0
  %373 = vmatpush1.msra.mxu0 0.0
  %374 = vmatprep.subr.mxu0 0.0
  %375 = vmatpush1.msra.mxu0 0.0
  %376 = vmatprep.subr.mxu0 0.0
  %377 = vmatpush1.msra.mxu0 0.0
  %378 = vmatprep.subr.mxu0 0.0
  %379 = vmatpush1.msra.mxu0 0.0
  %380 = vmatprep.subr.mxu0 0.0
  %381 = vmatpush1.msra.mxu0 0.0
  %382 = vmatprep.subr.mxu0 0.0
  %383 = vmatpush1.msra.mxu0 0.0
  %384 = vmatprep.subr.mxu0 0.0
  %385 = vmatpush1.msra.mxu0 0.0
  %386 = vmatprep.subr.mxu0 0.0
  %387 = vmatpush1.msra.mxu0 0.0
  %388 = vmatprep.subr.mxu0 0.0
  %389 = vmatpush1.msra.mxu0 0.0
  %390 = vmatprep.subr.mxu0 0.0
  %391 = vmatpush1.msra.mxu0 0.0
  %392 = vmatprep.subr.mxu0 0.0
  %393 = vmatpush1.msra.mxu0 0.0
  %394 = vmatprep.mubr.f32.mxu0 0.0
  %395 = vmatmul.mubr.f32.gmra.mrb[0].mxu0 %v254
  %v396 = vpop.f32.mrb[0].mxu0
  %v397 = vadd.f32 %v38, %v396
  %v398 = vpop.f32.mrb[0].mxu0
  %399 = vdwg.mxu0
  %v400 = vadd.f32 %v256, %v326
  %v401 = vsub.f32 0.0, %v400
  %v402 = vmul.f32 %v401, 1.442695
  %v403 = vpow.pop %v402
  %v404 = vadd.f32 %v403, 1.0
  %v405 = vrcp.pop %v404
  %v406 = vmul.f32 1.0, %v405
  %v407 = vadd.f32 %v257, %v328
  %v408 = vsub.f32 0.0, %v407
  %v409 = vmul.f32 %v408, 1.442695
  %v410 = vpow.pop %v409
  %v411 = vadd.f32 %v410, 1.0
  %v412 = vrcp.pop %v411
  %v413 = vmul.f32 1.0, %v412
  %v414 = vmul.f32 %v406, %v397
  %v415 = vadd.f32 %v258, %v414
  %v416 = vtanh.pop %v415
  %v417 = vsub.f32 %v254, %v416
  %v418 = vmul.f32 %v413, %v417
  %v419 = vadd.f32 %v416, %v418
  %s420 = scalar_lea.vmem %s0, 48
  %v421 = vld [vmem:[%s420] sm:$0xff]
  %v422 = vld [vmem:[%s420 + $0x8] sm:$0xff]
  %v423 = vld [vmem:[%s420 + $0x10] sm:$0xff]
  %424 = vmatprep.subr.mxu0 %v47
  %425 = vmatpush1.msra.mxu0 %v46
  %426 = vmatprep.subr.mxu0 %v50
  %427 = vmatpush1.msra.mxu0 %v49
  %428 = vmatprep.subr.mxu0 %v53
  %429 = vmatpush1.msra.mxu0 %v52
  %430 = vmatprep.subr.mxu0 %v56
  %431 = vmatpush1.msra.mxu0 %v55
  %432 = vmatprep.subr.mxu0 %v59
  %433 = vmatpush1.msra.mxu0 %v58
  %434 = vmatprep.subr.mxu0 %v62
  %435 = vmatpush1.msra.mxu0 %v61
  %436 = vmatprep.subr.mxu0 %v65
  %437 = vmatpush1.msra.mxu0 %v64
  %438 = vmatprep.subr.mxu0 %v68
  %439 = vmatpush1.msra.mxu0 %v67
  %440 = vmatprep.subr.mxu0 %v71
  %441 = vmatpush1.msra.mxu0 %v70
  %442 = vmatprep.subr.mxu0 %v74
  %443 = vmatpush1.msra.mxu0 %v73
  %444 = vmatprep.subr.mxu0 %v77
  %445 = vmatpush1.msra.mxu0 %v76
  %446 = vmatprep.subr.mxu0 %v80
  %447 = vmatpush1.msra.mxu0 %v79
  %448 = vmatprep.subr.mxu0 %v83
  %449 = vmatpush1.msra.mxu0 %v82
  %450 = vmatprep.subr.mxu0 %v86
  %451 = vmatpush1.msra.mxu0 %v85
  %452 = vmatprep.subr.mxu0 %v89
  %453 = vmatpush1.msra.mxu0 %v88
  %454 = vmatprep.subr.mxu0 %v92
  %455 = vmatpush1.msra.mxu0 %v91
  %456 = vmatprep.subr.mxu0 0.0
  %457 = vmatpush1.msra.mxu0 0.0
  %458 = vmatprep.subr.mxu0 0.0
  %459 = vmatpush1.msra.mxu0 0.0
  %460 = vmatprep.subr.mxu0 0.0
  %461 = vmatpush1.msra.mxu0 0.0
  %462 = vmatprep.subr.mxu0 0.0
  %463 = vmatpush1.msra.mxu0 0.0
  %464 = vmatprep.subr.mxu0 0.0
  %465 = vmatpush1.msra.mxu0 0.0
  %466 = vmatprep.subr.mxu0 0.0
  %467 = vmatpush1.msra.mxu0 0.0
  %468 = vmatprep.subr.mxu0 0.0
  %469 = vmatpush1.msra.mxu0 0.0
  %470 = vmatprep.subr.mxu0 0.0
  %471 = vmatpush1.msra.mxu0 0.0
  %472 = vmatprep.subr.mxu0 0.0
  %473 = vmatpush1.msra.mxu0 0.0
  %474 = vmatprep.subr.mxu0 0.0
  %475 = vmatpush1.msra.mxu0 0.0
  %476 = vmatprep.subr.mxu0 0.0
  %477 = vmatpush1.msra.mxu0 0.0
  %478 = vmatprep.subr.mxu0 0.0
  %479 = vmatpush1.msra.mxu0 0.0
  %480 = vmatprep.subr.mxu0 0.0
  %481 = vmatpush1.msra.mxu0 0.0
  %482 = vmatprep.subr.mxu0 0.0
  %483 = vmatpush1.msra.mxu0 0.0
  %484 = vmatprep.subr.mxu0 0.0
  %485 = vmatpush1.msra.mxu0 0.0
  %486 = vmatprep.subr.mxu0 0.0
  %487 = vmatpush1.msra.mxu0 0.0
  %488 = vmatprep.mubr.f32.mxu0 0.0
  %489 = vmatmul.mubr.f32.gmra.mrb[0].mxu0 %v419
  %v490 = vpop.f32.mrb[0].mxu0
  %v491 = vadd.f32 %v30, %v490
  %v492 = vpop.f32.mrb[0].mxu0
  %v493 = vadd.f32 %v34, %v492
  %494 = vdwg.mxu0
  %495 = vmatprep.subr.mxu0 0.0
  %496 = vmatpush1.msra.mxu0 %v48
  %497 = vmatprep.subr.mxu0 0.0
  %498 = vmatpush1.msra.mxu0 %v51
  %499 = vmatprep.subr.mxu0 0.0
  %500 = vmatpush1.msra.mxu0 %v54
  %501 = vmatprep.subr.mxu0 0.0
  %502 = vmatpush1.msra.mxu0 %v57
  %503 = vmatprep.subr.mxu0 0.0
  %504 = vmatpush1.msra.mxu0 %v60
  %505 = vmatprep.subr.mxu0 0.0
  %506 = vmatpush1.msra.mxu0 %v63
  %507 = vmatprep.subr.mxu0 0.0
  %508 = vmatpush1.msra.mxu0 %v66
  %509 = vmatprep.subr.mxu0 0.0
  %510 = vmatpush1.msra.mxu0 %v69
  %511 = vmatprep.subr.mxu0 0.0
  %512 = vmatpush1.msra.mxu0 %v72
  %513 = vmatprep.subr.mxu0 0.0
  %514 = vmatpush1.msra.mxu0 %v75
  %515 = vmatprep.subr.mxu0 0.0
  %516 = vmatpush1.msra.mxu0 %v78
  %517 = vmatprep.subr.mxu0 0.0
  %518 = vmatpush1.msra.mxu0 %v81
  %519 = vmatprep.subr.mxu0 0.0
  %520 = vmatpush1.msra.mxu0 %v84
  %521 = vmatprep.subr.mxu0 0.0
  %522 = vmatpush1.msra.mxu0 %v87
  %523 = vmatprep.subr.mxu0 0.0
  %524 = vmatpush1.msra.mxu0 %v90
  %525 = vmatprep.subr.mxu0 0.0
  %526 = vmatpush1.msra.mxu0 %v93
  %527 = vmatprep.subr.mxu0 0.0
  %528 = vmatpush1.msra.mxu0 0.0
  %529 = vmatprep.subr.mxu0 0.0
  %530 = vmatpush1.msra.mxu0 0.0
  %531 = vmatprep.subr.mxu0 0.0
  %532 = vmatpush1.msra.mxu0 0.0
  %533 = vmatprep.subr.mxu0 0.0
  %534 = vmatpush1.msra.mxu0 0.0
  %535 = vmatprep.subr.mxu0 0.0
  %536 = vmatpush1.msra.mxu0 0.0
  %537 = vmatprep.subr.mxu0 0.0
  %538 = vmatpush1.msra.mxu0 0.0
  %539 = vmatprep.subr.mxu0 0.0
  %540 = vmatpush1.msra.mxu0 0.0
  %541 = vmatprep.subr.mxu0 0.0
  %542 = vmatpush1.msra.mxu0 0.0
  %543 = vmatprep.subr.mxu0 0.0
  %544 = vmatpush1.msra.mxu0 0.0
  %545 = vmatprep.subr.mxu0 0.0
  %546 = vmatpush1.msra.mxu0 0.0
  %547 = vmatprep.subr.mxu0 0.0
  %548 = vmatpush1.msra.mxu0 0.0
  %549 = vmatprep.subr.mxu0 0.0
  %550 = vmatpush1.msra.mxu0 0.0
  %551 = vmatprep.subr.mxu0 0.0
  %552 = vmatpush1.msra.mxu0 0.0
  %553 = vmatprep.subr.mxu0 0.0
  %554 = vmatpush1.msra.mxu0 0.0
  %555 = vmatprep.subr.mxu0 0.0
  %556 = vmatpush1.msra.mxu0 0.0
  %557 = vmatprep.subr.mxu0 0.0
  %558 = vmatpush1.msra.mxu0 0.0
  %559 = vmatprep.mubr.f32.mxu0 0.0
  %560 = vmatmul.mubr.f32.gmra.mrb[0].mxu0 %v419
  %v561 = vpop.f32.mrb[0].mxu0
  %v562 = vadd.f32 %v38, %v561
  %v563 = vpop.f32.mrb[0].mxu0
  %564 = vdwg.mxu0
  %v565 = vadd.f32 %v421, %v491
  %v566 = vsub.f32 0.0, %v565
  %v567 = vmul.f32 %v566, 1.442695
  %v568 = vpow.pop %v567
  %v569 = vadd.f32 %v568, 1.0
  %v570 = vrcp.pop %v569
  %v571 = vmul.f32 1.0, %v570
  %v572 = vadd.f32 %v422, %v493
  %v573 = vsub.f32 0.0, %v572
  %v574 = vmul.f32 %v573, 1.442695
  %v575 = vpow.pop %v574
  %v576 = vadd.f32 %v575, 1.0
  %v577 = vrcp.pop %v576
  %v578 = vmul.f32 1.0, %v577
  %v579 = vmul.f32 %v571, %v562
  %v580 = vadd.f32 %v423, %v579
  %v581 = vtanh.pop %v580
  %v582 = vsub.f32 %v419, %v581
  %v583 = vmul.f32 %v578, %v582
  %v584 = vadd.f32 %v581, %v583
  %s585 = scalar_lea.vmem %s0, 72
  %v586 = vld [vmem:[%s585] sm:$0xff]
  %v587 = vld [vmem:[%s585 + $0x8] sm:$0xff]
  %v588 = vld [vmem:[%s585 + $0x10] sm:$0xff]
  %589 = vmatprep.subr.mxu0 %v47
  %590 = vmatpush1.msra.mxu0 %v46
  %591 = vmatprep.subr.mxu0 %v50
  %592 = vmatpush1.msra.mxu0 %v49
  %593 = vmatprep.subr.mxu0 %v53
  %594 = vmatpush1.msra.mxu0 %v52
  %595 = vmatprep.subr.mxu0 %v56
  %596 = vmatpush1.msra.mxu0 %v55
  %597 = vmatprep.subr.mxu0 %v59
  %598 = vmatpush1.msra.mxu0 %v58
  %599 = vmatprep.subr.mxu0 %v62
  %600 = vmatpush1.msra.mxu0 %v61
  %601 = vmatprep.subr.mxu0 %v65
  %602 = vmatpush1.msra.mxu0 %v64
  %603 = vmatprep.subr.mxu0 %v68
  %604 = vmatpush1.msra.mxu0 %v67
  %605 = vmatprep.subr.mxu0 %v71
  %606 = vmatpush1.msra.mxu0 %v70
  %607 = vmatprep.subr.mxu0 %v74
  %608 = vmatpush1.msra.mxu0 %v73
  %609 = vmatprep.subr.mxu0 %v77
  %610 = vmatpush1.msra.mxu0 %v76
  %611 = vmatprep.subr.mxu0 %v80
  %612 = vmatpush1.msra.mxu0 %v79
  %613 = vmatprep.subr.mxu0 %v83
  %614 = vmatpush1.msra.mxu0 %v82
  %615 = vmatprep.subr.mxu0 %v86
  %616 = vmatpush1.msra.mxu0 %v85
  %617 = vmatprep.subr.mxu0 %v89
  %618 = vmatpush1.msra.mxu0 %v88
  %619 = vmatprep.subr.mxu0 %v92
  %620 = vmatpush1.msra.mxu0 %v91
  %621 = vmatprep.subr.mxu0 0.0
  %622 = vmatpush1.msra.mxu0 0.0
  %623 = vmatprep.subr.mxu0 0.0
  %624 = vmatpush1.msra.mxu0 0.0
  %625 = vmatprep.subr.mxu0 0.0
  %626 = vmatpush1.msra.mxu0 0.0
  %627 = vmatprep.subr.mxu0 0.0
  %628 = vmatpush1.msra.mxu0 0.0
  %629 = vmatprep.subr.mxu0 0.0
  %630 = vmatpush1.msra.mxu0 0.0
  %631 = vmatprep.subr.mxu0 0.0
  %632 = vmatpush1.msra.mxu0 0.0
  %633 = vmatprep.subr.mxu0 0.0
  %634 = vmatpush1.msra.mxu0 0.0
  %635 = vmatprep.subr.mxu0 0.0
  %636 = vmatpush1.msra.mxu0 0.0
  %637 = vmatprep.subr.mxu0 0.0
  %638 = vmatpush1.msra.mxu0 0.0
  %639 = vmatprep.subr.mxu0 0.0
  %640 = vmatpush1.msra.mxu0 0.0
  %641 = vmatprep.subr.mxu0 0.0
  %642 = vmatpush1.msra.mxu0 0.0
  %643 = vmatprep.subr.mxu0 0.0
  %644 = vmatpush1.msra.mxu0 0.0
  %645 = vmatprep.subr.mxu0 0.0
  %646 = vmatpush1.msra.mxu0 0.0
  %647 = vmatprep.subr.mxu0 0.0
  %648 = vmatpush1.msra.mxu0 0.0
  %649 = vmatprep.subr.mxu0 0.0
  %650 = vmatpush1.msra.mxu0 0.0
  %651 = vmatprep.subr.mxu0 0.0
  %652 = vmatpush1.msra.mxu0 0.0
  %653 = vmatprep.mubr.f32.mxu0 0.0
  %654 = vmatmul.mubr.f32.gmra.mrb[0].mxu0 %v584
  %v655 = vpop.f32.mrb[0].mxu0
  %v656 = vadd.f32 %v30, %v655
  %v657 = vpop.f32.mrb[0].mxu0
  %v658 = vadd.f32 %v34, %v657
  %659 = vdwg.mxu0
  %660 = vmatprep.subr.mxu0 0.0
  %661 = vmatpush1.msra.mxu0 %v48
  %662 = vmatprep.subr.mxu0 0.0
  %663 = vmatpush1.msra.mxu0 %v51
  %664 = vmatprep.subr.mxu0 0.0
  %665 = vmatpush1.msra.mxu0 %v54
  %666 = vmatprep.subr.mxu0 0.0
  %667 = vmatpush1.msra.mxu0 %v57
  %668 = vmatprep.subr.mxu0 0.0
  %669 = vmatpush1.msra.mxu0 %v60
  %670 = vmatprep.subr.mxu0 0.0
  %671 = vmatpush1.msra.mxu0 %v63
  %672 = vmatprep.subr.mxu0 0.0
  %673 = vmatpush1.msra.mxu0 %v66
  %674 = vmatprep.subr.mxu0 0.0
  %675 = vmatpush1.msra.mxu0 %v69
  %676 = vmatprep.subr.mxu0 0.0
  %677 = vmatpush1.msra.mxu0 %v72
  %678 = vmatprep.subr.mxu0 0.0
  %679 = vmatpush1.msra.mxu0 %v75
  %680 = vmatprep.subr.mxu0 0.0
  %681 = vmatpush1.msra.mxu0 %v78
  %682 = vmatprep.subr.mxu0 0.0
  %683 = vmatpush1.msra.mxu0 %v81
  %684 = vmatprep.subr.mxu0 0.0
  %685 = vmatpush1.msra.mxu0 %v84
  %686 = vmatprep.subr.mxu0 0.0
  %687 = vmatpush1.msra.mxu0 %v87
  %688 = vmatprep.subr.mxu0 0.0
  %689 = vmatpush1.msra.mxu0 %v90
  %690 = vmatprep.subr.mxu0 0.0
  %691 = vmatpush1.msra.mxu0 %v93
  %692 = vmatprep.subr.mxu0 0.0
  %693 = vmatpush1.msra.mxu0 0.0
  %694 = vmatprep.subr.mxu0 0.0
  %695 = vmatpush1.msra.mxu0 0.0
  %696 = vmatprep.subr.mxu0 0.0
  %697 = vmatpush1.msra.mxu0 0.0
  %698 = vmatprep.subr.mxu0 0.0
  %699 = vmatpush1.msra.mxu0 0.0
  %700 = vmatprep.subr.mxu0 0.0
  %701 = vmatpush1.msra.mxu0 0.0
  %702 = vmatprep.subr.mxu0 0.0
  %703 = vmatpush1.msra.mxu0 0.0
  %704 = vmatprep.subr.mxu0 0.0
  %705 = vmatpush1.msra.mxu0 0.0
  %706 = vmatprep.subr.mxu0 0.0
  %707 = vmatpush1.msra.mxu0 0.0
  %708 = vmatprep.subr.mxu0 0.0
  %709 = vmatpush1.msra.mxu0 0.0
  %710 = vmatprep.subr.mxu0 0.0
  %711 = vmatpush1.msra.mxu0 0.0
  %712 = vmatprep.subr.mxu0 0.0
  %713 = vmatpush1.msra.mxu0 0.0
  %714 = vmatprep.subr.mxu0 0.0
  %715 = vmatpush1.msra.mxu0 0.0
  %716 = vmatprep.subr.mxu0 0.0
  %717 = vmatpush1.msra.mxu0 0.0
  %718 = vmatprep.subr.mxu0 0.0
  %719 = vmatpush1.msra.mxu0 0.0
  %720 = vmatprep.subr.mxu0 0.0
  %721 = vmatpush1.msra.mxu0 0.0
  %722 = vmatprep.subr.mxu0 0.0
  %723 = vmatpush1.msra.mxu0 0.0
  %724 = vmatprep.mubr.f32.mxu0 0.0
  %725 = vmatmul.mubr.f32.gmra.mrb[0].mxu0 %v584
  %v726 = vpop.f32.mrb[0].mxu0
  %v727 = vadd.f32 %v38, %v726
  %v728 = vpop.f32.mrb[0].mxu0
  %729 = vdwg.mxu0
  %v730 = vadd.f32 %v586, %v656
  %v731 = vsub.f32 0.0, %v730
  %v732 = vmul.f32 %v731, 1.442695
  %v733 = vpow.pop %v732
  %v734 = vadd.f32 %v733, 1.0
  %v735 = vrcp.pop %v734
  %v736 = vmul.f32 1.0, %v735
  %v737 = vadd.f32 %v587, %v658
  %v738 = vsub.f32 0.0, %v737
  %v739 = vmul.f32 %v738, 1.442695
  %v740 = vpow.pop %v739
  %v741 = vadd.f32 %v740, 1.0
  %v742 = vrcp.pop %v741
  %v743 = vmul.f32 1.0, %v742
  %v744 = vmul.f32 %v736, %v727
  %v745 = vadd.f32 %v588, %v744
  %v746 = vtanh.pop %v745
  %v747 = vsub.f32 %v584, %v746
  %v748 = vmul.f32 %v743, %v747
  %v749 = vadd.f32 %v746, %v748
  %s750 = scalar_lea.vmem %s0, 96
  %v751 = vld [vmem:[%s750] sm:$0xff]
  %v752 = vld [vmem:[%s750 + $0x8] sm:$0xff]
  %v753 = vld [vmem:[%s750 + $0x10] sm:$0xff]
  %754 = vmatprep.subr.mxu0 %v47
  %755 = vmatpush1.msra.mxu0 %v46
  %756 = vmatprep.subr.mxu0 %v50
  %757 = vmatpush1.msra.mxu0 %v49
  %758 = vmatprep.subr.mxu0 %v53
  %759 = vmatpush1.msra.mxu0 %v52
  %760 = vmatprep.subr.mxu0 %v56
  %761 = vmatpush1.msra.mxu0 %v55
  %762 = vmatprep.subr.mxu0 %v59
  %763 = vmatpush1.msra.mxu0 %v58
  %764 = vmatprep.subr.mxu0 %v62
  %765 = vmatpush1.msra.mxu0 %v61
  %766 = vmatprep.subr.mxu0 %v65
  %767 = vmatpush1.msra.mxu0 %v64
  %768 = vmatprep.subr.mxu0 %v68
  %769 = vmatpush1.msra.mxu0 %v67
  %770 = vmatprep.subr.mxu0 %v71
  %771 = vmatpush1.msra.mxu0 %v70
  %772 = vmatprep.subr.mxu0 %v74
  %773 = vmatpush1.msra.mxu0 %v73
  %774 = vmatprep.subr.mxu0 %v77
  %775 = vmatpush1.msra.mxu0 %v76
  %776 = vmatprep.subr.mxu0 %v80
  %777 = vmatpush1.msra.mxu0 %v79
  %778 = vmatprep.subr.mxu0 %v83
  %779 = vmatpush1.msra.mxu0 %v82
  %780 = vmatprep.subr.mxu0 %v86
  %781 = vmatpush1.msra.mxu0 %v85
  %782 = vmatprep.subr.mxu0 %v89
  %783 = vmatpush1.msra.mxu0 %v88
  %784 = vmatprep.subr.mxu0 %v92
  %785 = vmatpush1.msra.mxu0 %v91
  %786 = vmatprep.subr.mxu0 0.0
  %787 = vmatpush1.msra.mxu0 0.0
  %788 = vmatprep.subr.mxu0 0.0
  %789 = vmatpush1.msra.mxu0 0.0
  %790 = vmatprep.subr.mxu0 0.0
  %791 = vmatpush1.msra.mxu0 0.0
  %792 = vmatprep.subr.mxu0 0.0
  %793 = vmatpush1.msra.mxu0 0.0
  %794 = vmatprep.subr.mxu0 0.0
  %795 = vmatpush1.msra.mxu0 0.0
  %796 = vmatprep.subr.mxu0 0.0
  %797 = vmatpush1.msra.mxu0 0.0
  %798 = vmatprep.subr.mxu0 0.0
  %799 = vmatpush1.msra.mxu0 0.0
  %800 = vmatprep.subr.mxu0 0.0
  %801 = vmatpush1.msra.mxu0 0.0
  %802 = vmatprep.subr.mxu0 0.0
  %803 = vmatpush1.msra.mxu0 0.0
  %804 = vmatprep.subr.mxu0 0.0
  %805 = vmatpush1.msra.mxu0 0.0
  %806 = vmatprep.subr.mxu0 0.0
  %807 = vmatpush1.msra.mxu0 0.0
  %808 = vmatprep.subr.mxu0 0.0
  %809 = vmatpush1.msra.mxu0 0.0
  %810 = vmatprep.subr.mxu0 0.0
  %811 = vmatpush1.msra.mxu0 0.0
  %812 = vmatprep.subr.mxu0 0.0
  %813 = vmatpush1.msra.mxu0 0.0
  %814 = vmatprep.subr.mxu0 0.0
  %815 = vmatpush1.msra.mxu0 0.0
  %816 = vmatprep.subr.mxu0 0.0
  %817 = vmatpush1.msra.mxu0 0.0
  %818 = vmatprep.mubr.f32.mxu0 0.0
  %819 = vmatmul.mubr.f32.gmra.mrb[0].mxu0 %v749
  %v820 = vpop.f32.mrb[0].mxu0
  %v821 = vadd.f32 %v30, %v820
  %v822 = vpop.f32.mrb[0].mxu0
  %v823 = vadd.f32 %v34, %v822
  %824 = vdwg.mxu0
  %825 = vmatprep.subr.mxu0 0.0
  %826 = vmatpush1.msra.mxu0 %v48
  %827 = vmatprep.subr.mxu0 0.0
  %828 = vmatpush1.msra.mxu0 %v51
  %829 = vmatprep.subr.mxu0 0.0
  %830 = vmatpush1.msra.mxu0 %v54
  %831 = vmatprep.subr.mxu0 0.0
  %832 = vmatpush1.msra.mxu0 %v57
  %833 = vmatprep.subr.mxu0 0.0
  %834 = vmatpush1.msra.mxu0 %v60
  %835 = vmatprep.subr.mxu0 0.0
  %836 = vmatpush1.msra.mxu0 %v63
  %837 = vmatprep.subr.mxu0 0.0
  %838 = vmatpush1.msra.mxu0 %v66
  %839 = vmatprep.subr.mxu0 0.0
  %840 = vmatpush1.msra.mxu0 %v69
  %841 = vmatprep.subr.mxu0 0.0
  %842 = vmatpush1.msra.mxu0 %v72
  %843 = vmatprep.subr.mxu0 0.0
  %844 = vmatpush1.msra.mxu0 %v75
  %845 = vmatprep.subr.mxu0 0.0
  %846 = vmatpush1.msra.mxu0 %v78
  %847 = vmatprep.subr.mxu0 0.0
  %848 = vmatpush1.msra.mxu0 %v81
  %849 = vmatprep.subr.mxu0 0.0
  %850 = vmatpush1.msra.mxu0 %v84
  %851 = vmatprep.subr.mxu0 0.0
  %852 = vmatpush1.msra.mxu0 %v87
  %853 = vmatprep.subr.mxu0 0.0
  %854 = vmatpush1.msra.mxu0 %v90
  %855 = vmatprep.subr.mxu0 0.0
  %856 = vmatpush1.msra.mxu0 %v93
  %857 = vmatprep.subr.mxu0 0.0
  %858 = vmatpush1.msra.mxu0 0.0
  %859 = vmatprep.subr.mxu0 0.0
  %860 = vmatpush1.msra.mxu0 0.0
  %861 = vmatprep.subr.mxu0 0.0
  %862 = vmatpush1.msra.mxu0 0.0
  %863 = vmatprep.subr.mxu0 0.0
  %864 = vmatpush1.msra.mxu0 0.0
  %865 = vmatprep.subr.mxu0 0.0
  %866 = vmatpush1.msra.mxu0 0.0
  %867 = vmatprep.subr.mxu0 0.0
  %868 = vmatpush1.msra.mxu0 0.0
  %869 = vmatprep.subr.mxu0 0.0
  %870 = vmatpush1.msra.mxu0 0.0
  %871 = vmatprep.subr.mxu0 0.0
  %872 = vmatpush1.msra.mxu0 0.0
  %873 = vmatprep.subr.mxu0 0.0
  %874 = vmatpush1.msra.mxu0 0.0
  %875 = vmatprep.subr.mxu0 0.0
  %876 = vmatpush1.msra.mxu0 0.0
  %877 = vmatprep.subr.mxu0 0.0
  %878 = vmatpush1.msra.mxu0 0.0
  %879 = vmatprep.subr.mxu0 0.0
  %880 = vmatpush1.msra.mxu0 0.0
  %881 = vmatprep.subr.mxu0 0.0
  %882 = vmatpush1.msra.mxu0 0.0
  %883 = vmatprep.subr.mxu0 0.0
  %884 = vmatpush1.msra.mxu0 0.0
  %885 = vmatprep.subr.mxu0 0.0
  %886 = vmatpush1.msra.mxu0 0.0
  %887 = vmatprep.subr.mxu0 0.0
  %888 = vmatpush1.msra.mxu0 0.0
  %889 = vmatprep.mubr.f32.mxu0 0.0
  %890 = vmatmul.mubr.f32.gmra.mrb[0].mxu0 %v749
  %v891 = vpop.f32.mrb[0].mxu0
  %v892 = vadd.f32 %v38, %v891
  %v893 = vpop.f32.mrb[0].mxu0
  %894 = vdwg.mxu0
  %v895 = vadd.f32 %v751, %v821
  %v896 = vsub.f32 0.0, %v895
  %v897 = vmul.f32 %v896, 1.442695
  %v898 = vpow.pop %v897
  %v899 = vadd.f32 %v898, 1.0
  %v900 = vrcp.pop %v899
  %v901 = vmul.f32 1.0, %v900
  %v902 = vadd.f32 %v752, %v823
  %v903 = vsub.f32 0.0, %v902
  %v904 = vmul.f32 %v903, 1.442695
  %v905 = vpow.pop %v904
  %v906 = vadd.f32 %v905, 1.0
  %v907 = vrcp.pop %v906
  %v908 = vmul.f32 1.0, %v907
  %v909 = vmul.f32 %v901, %v892
  %v910 = vadd.f32 %v753, %v909
  %v911 = vtanh.pop %v910
  %v912 = vsub.f32 %v749, %v911
  %v913 = vmul.f32 %v908, %v912
  %v914 = vadd.f32 %v911, %v913
  %s915 = scalar_lea.vmem %s0, 120
  %v916 = vld [vmem:[%s915] sm:$0xff]
  %v917 = vld [vmem:[%s915 + $0x8] sm:$0xff]
  %v918 = vld [vmem:[%s915 + $0x10] sm:$0xff]
  %919 = vmatprep.subr.mxu0 %v47
  %920 = vmatpush1.msra.mxu0 %v46
  %921 = vmatprep.subr.mxu0 %v50
  %922 = vmatpush1.msra.mxu0 %v49
  %923 = vmatprep.subr.mxu0 %v53
  %924 = vmatpush1.msra.mxu0 %v52
  %925 = vmatprep.subr.mxu0 %v56
  %926 = vmatpush1.msra.mxu0 %v55
  %927 = vmatprep.subr.mxu0 %v59
  %928 = vmatpush1.msra.mxu0 %v58
  %929 = vmatprep.subr.mxu0 %v62
  %930 = vmatpush1.msra.mxu0 %v61
  %931 = vmatprep.subr.mxu0 %v65
  %932 = vmatpush1.msra.mxu0 %v64
  %933 = vmatprep.subr.mxu0 %v68
  %934 = vmatpush1.msra.mxu0 %v67
  %935 = vmatprep.subr.mxu0 %v71
  %936 = vmatpush1.msra.mxu0 %v70
  %937 = vmatprep.subr.mxu0 %v74
  %938 = vmatpush1.msra.mxu0 %v73
  %939 = vmatprep.subr.mxu0 %v77
  %940 = vmatpush1.msra.mxu0 %v76
  %941 = vmatprep.subr.mxu0 %v80
  %942 = vmatpush1.msra.mxu0 %v79
  %943 = vmatprep.subr.mxu0 %v83
  %944 = vmatpush1.msra.mxu0 %v82
  %945 = vmatprep.subr.mxu0 %v86
  %946 = vmatpush1.msra.mxu0 %v85
  %947 = vmatprep.subr.mxu0 %v89
  %948 = vmatpush1.msra.mxu0 %v88
  %949 = vmatprep.subr.mxu0 %v92
  %950 = vmatpush1.msra.mxu0 %v91
  %951 = vmatprep.subr.mxu0 0.0
  %952 = vmatpush1.msra.mxu0 0.0
  %953 = vmatprep.subr.mxu0 0.0
  %954 = vmatpush1.msra.mxu0 0.0
  %955 = vmatprep.subr.mxu0 0.0
  %956 = vmatpush1.msra.mxu0 0.0
  %957 = vmatprep.subr.mxu0 0.0
  %958 = vmatpush1.msra.mxu0 0.0
  %959 = vmatprep.subr.mxu0 0.0
  %960 = vmatpush1.msra.mxu0 0.0
  %961 = vmatprep.subr.mxu0 0.0
  %962 = vmatpush1.msra.mxu0 0.0
  %963 = vmatprep.subr.mxu0 0.0
  %964 = vmatpush1.msra.mxu0 0.0
  %965 = vmatprep.subr.mxu0 0.0
  %966 = vmatpush1.msra.mxu0 0.0
  %967 = vmatprep.subr.mxu0 0.0
  %968 = vmatpush1.msra.mxu0 0.0
  %969 = vmatprep.subr.mxu0 0.0
  %970 = vmatpush1.msra.mxu0 0.0
  %971 = vmatprep.subr.mxu0 0.0
  %972 = vmatpush1.msra.mxu0 0.0
  %973 = vmatprep.subr.mxu0 0.0
  %974 = vmatpush1.msra.mxu0 0.0
  %975 = vmatprep.subr.mxu0 0.0
  %976 = vmatpush1.msra.mxu0 0.0
  %977 = vmatprep.subr.mxu0 0.0
  %978 = vmatpush1.msra.mxu0 0.0
  %979 = vmatprep.subr.mxu0 0.0
  %980 = vmatpush1.msra.mxu0 0.0
  %981 = vmatprep.subr.mxu0 0.0
  %982 = vmatpush1.msra.mxu0 0.0
  %983 = vmatprep.mubr.f32.mxu0 0.0
  %984 = vmatmul.mubr.f32.gmra.mrb[0].mxu0 %v914
  %v985 = vpop.f32.mrb[0].mxu0
  %v986 = vadd.f32 %v30, %v985
  %v987 = vpop.f32.mrb[0].mxu0
  %v988 = vadd.f32 %v34, %v987
  %989 = vdwg.mxu0
  %990 = vmatprep.subr.mxu0 0.0
  %991 = vmatpush1.msra.mxu0 %v48
  %992 = vmatprep.subr.mxu0 0.0
  %993 = vmatpush1.msra.mxu0 %v51
  %994 = vmatprep.subr.mxu0 0.0
  %995 = vmatpush1.msra.mxu0 %v54
  %996 = vmatprep.subr.mxu0 0.0
  %997 = vmatpush1.msra.mxu0 %v57
  %998 = vmatprep.subr.mxu0 0.0
  %999 = vmatpush1.msra.mxu0 %v60
  %1000 = vmatprep.subr.mxu0 0.0
  %1001 = vmatpush1.msra.mxu0 %v63
  %1002 = vmatprep.subr.mxu0 0.0
  %1003 = vmatpush1.msra.mxu0 %v66
  %1004 = vmatprep.subr.mxu0 0.0
  %1005 = vmatpush1.msra.mxu0 %v69
  %1006 = vmatprep.subr.mxu0 0.0
  %1007 = vmatpush1.msra.mxu0 %v72
  %1008 = vmatprep.subr.mxu0 0.0
  %1009 = vmatpush1.msra.mxu0 %v75
  %1010 = vmatprep.subr.mxu0 0.0
  %1011 = vmatpush1.msra.mxu0 %v78
  %1012 = vmatprep.subr.mxu0 0.0
  %1013 = vmatpush1.msra.mxu0 %v81
  %1014 = vmatprep.subr.mxu0 0.0
  %1015 = vmatpush1.msra.mxu0 %v84
  %1016 = vmatprep.subr.mxu0 0.0
  %1017 = vmatpush1.msra.mxu0 %v87
  %1018 = vmatprep.subr.mxu0 0.0
  %1019 = vmatpush1.msra.mxu0 %v90
  %1020 = vmatprep.subr.mxu0 0.0
  %1021 = vmatpush1.msra.mxu0 %v93
  %1022 = vmatprep.subr.mxu0 0.0
  %1023 = vmatpush1.msra.mxu0 0.0
  %1024 = vmatprep.subr.mxu0 0.0
  %1025 = vmatpush1.msra.mxu0 0.0
  %1026 = vmatprep.subr.mxu0 0.0
  %1027 = vmatpush1.msra.mxu0 0.0
  %1028 = vmatprep.subr.mxu0 0.0
  %1029 = vmatpush1.msra.mxu0 0.0
  %1030 = vmatprep.subr.mxu0 0.0
  %1031 = vmatpush1.msra.mxu0 0.0
  %1032 = vmatprep.subr.mxu0 0.0
  %1033 = vmatpush1.msra.mxu0 0.0
  %1034 = vmatprep.subr.mxu0 0.0
  %1035 = vmatpush1.msra.mxu0 0.0
  %1036 = vmatprep.subr.mxu0 0.0
  %1037 = vmatpush1.msra.mxu0 0.0
  %1038 = vmatprep.subr.mxu0 0.0
  %1039 = vmatpush1.msra.mxu0 0.0
  %1040 = vmatprep.subr.mxu0 0.0
  %1041 = vmatpush1.msra.mxu0 0.0
  %1042 = vmatprep.subr.mxu0 0.0
  %1043 = vmatpush1.msra.mxu0 0.0
  %1044 = vmatprep.subr.mxu0 0.0
  %1045 = vmatpush1.msra.mxu0 0.0
  %1046 = vmatprep.subr.mxu0 0.0
  %1047 = vmatpush1.msra.mxu0 0.0
  %1048 = vmatprep.subr.mxu0 0.0
  %1049 = vmatpush1.msra.mxu0 0.0
  %1050 = vmatprep.subr.mxu0 0.0
  %1051 = vmatpush1.msra.mxu0 0.0
  %1052 = vmatprep.subr.mxu0 0.0
  %1053 = vmatpush1.msra.mxu0 0.0
  %1054 = vmatprep.mubr.f32.mxu0 0.0
  %1055 = vmatmul.mubr.f32.gmra.mrb[0].mxu0 %v914
  %v1056 = vpop.f32.mrb[0].mxu0
  %v1057 = vadd.f32 %v38, %v1056
  %v1058 = vpop.f32.mrb[0].mxu0
  %1059 = vdwg.mxu0
  %v1060 = vadd.f32 %v916, %v986
  %v1061 = vsub.f32 0.0, %v1060
  %v1062 = vmul.f32 %v1061, 1.442695
  %v1063 = vpow.pop %v1062
  %v1064 = vadd.f32 %v1063, 1.0
  %v1065 = vrcp.pop %v1064
  %v1066 = vmul.f32 1.0, %v1065
  %v1067 = vadd.f32 %v917, %v988
  %v1068 = vsub.f32 0.0, %v1067
  %v1069 = vmul.f32 %v1068, 1.442695
  %v1070 = vpow.pop %v1069
  %v1071 = vadd.f32 %v1070, 1.0
  %v1072 = vrcp.pop %v1071
  %v1073 = vmul.f32 1.0, %v1072
  %v1074 = vmul.f32 %v1066, %v1057
  %v1075 = vadd.f32 %v918, %v1074
  %v1076 = vtanh.pop %v1075
  %v1077 = vsub.f32 %v914, %v1076
  %v1078 = vmul.f32 %v1073, %v1077
  %v1079 = vadd.f32 %v1076, %v1078
  %s1080 = scalar_lea.vmem %s0, 144
  %v1081 = vld [vmem:[%s1080] sm:$0xff]
  %v1082 = vld [vmem:[%s1080 + $0x8] sm:$0xff]
  %v1083 = vld [vmem:[%s1080 + $0x10] sm:$0xff]
  %1084 = vmatprep.subr.mxu0 %v47
  %1085 = vmatpush1.msra.mxu0 %v46
  %1086 = vmatprep.subr.mxu0 %v50
  %1087 = vmatpush1.msra.mxu0 %v49
  %1088 = vmatprep.subr.mxu0 %v53
  %1089 = vmatpush1.msra.mxu0 %v52
  %1090 = vmatprep.subr.mxu0 %v56
  %1091 = vmatpush1.msra.mxu0 %v55
  %1092 = vmatprep.subr.mxu0 %v59
  %1093 = vmatpush1.msra.mxu0 %v58
  %1094 = vmatprep.subr.mxu0 %v62
  %1095 = vmatpush1.msra.mxu0 %v61
  %1096 = vmatprep.subr.mxu0 %v65
  %1097 = vmatpush1.msra.mxu0 %v64
  %1098 = vmatprep.subr.mxu0 %v68
  %1099 = vmatpush1.msra.mxu0 %v67
  %1100 = vmatprep.subr.mxu0 %v71
  %1101 = vmatpush1.msra.mxu0 %v70
  %1102 = vmatprep.subr.mxu0 %v74
  %1103 = vmatpush1.msra.mxu0 %v73
  %1104 = vmatprep.subr.mxu0 %v77
  %1105 = vmatpush1.msra.mxu0 %v76
  %1106 = vmatprep.subr.mxu0 %v80
  %1107 = vmatpush1.msra.mxu0 %v79
  %1108 = vmatprep.subr.mxu0 %v83
  %1109 = vmatpush1.msra.mxu0 %v82
  %1110 = vmatprep.subr.mxu0 %v86
  %1111 = vmatpush1.msra.mxu0 %v85
  %1112 = vmatprep.subr.mxu0 %v89
  %1113 = vmatpush1.msra.mxu0 %v88
  %1114 = vmatprep.subr.mxu0 %v92
  %1115 = vmatpush1.msra.mxu0 %v91
  %1116 = vmatprep.subr.mxu0 0.0
  %1117 = vmatpush1.msra.mxu0 0.0
  %1118 = vmatprep.subr.mxu0 0.0
  %1119 = vmatpush1.msra.mxu0 0.0
  %1120 = vmatprep.subr.mxu0 0.0
  %1121 = vmatpush1.msra.mxu0 0.0
  %1122 = vmatprep.subr.mxu0 0.0
  %1123 = vmatpush1.msra.mxu0 0.0
  %1124 = vmatprep.subr.mxu0 0.0
  %1125 = vmatpush1.msra.mxu0 0.0
  %1126 = vmatprep.subr.mxu0 0.0
  %1127 = vmatpush1.msra.mxu0 0.0
  %1128 = vmatprep.subr.mxu0 0.0
  %1129 = vmatpush1.msra.mxu0 0.0
  %1130 = vmatprep.subr.mxu0 0.0
  %1131 = vmatpush1.msra.mxu0 0.0
  %1132 = vmatprep.subr.mxu0 0.0
  %1133 = vmatpush1.msra.mxu0 0.0
  %1134 = vmatprep.subr.mxu0 0.0
  %1135 = vmatpush1.msra.mxu0 0.0
  %1136 = vmatprep.subr.mxu0 0.0
  %1137 = vmatpush1.msra.mxu0 0.0
  %1138 = vmatprep.subr.mxu0 0.0
  %1139 = vmatpush1.msra.mxu0 0.0
  %1140 = vmatprep.subr.mxu0 0.0
  %1141 = vmatpush1.msra.mxu0 0.0
  %1142 = vmatprep.subr.mxu0 0.0
  %1143 = vmatpush1.msra.mxu0 0.0
  %1144 = vmatprep.subr.mxu0 0.0
  %1145 = vmatpush1.msra.mxu0 0.0
  %1146 = vmatprep.subr.mxu0 0.0
  %1147 = vmatpush1.msra.mxu0 0.0
  %1148 = vmatprep.mubr.f32.mxu0 0.0
  %1149 = vmatmul.mubr.f32.gmra.mrb[0].mxu0 %v1079
  %v1150 = vpop.f32.mrb[0].mxu0
  %v1151 = vadd.f32 %v30, %v1150
  %v1152 = vpop.f32.mrb[0].mxu0
  %v1153 = vadd.f32 %v34, %v1152
  %1154 = vdwg.mxu0
  %1155 = vmatprep.subr.mxu0 0.0
  %1156 = vmatpush1.msra.mxu0 %v48
  %1157 = vmatprep.subr.mxu0 0.0
  %1158 = vmatpush1.msra.mxu0 %v51
  %1159 = vmatprep.subr.mxu0 0.0
  %1160 = vmatpush1.msra.mxu0 %v54
  %1161 = vmatprep.subr.mxu0 0.0
  %1162 = vmatpush1.msra.mxu0 %v57
  %1163 = vmatprep.subr.mxu0 0.0
  %1164 = vmatpush1.msra.mxu0 %v60
  %1165 = vmatprep.subr.mxu0 0.0
  %1166 = vmatpush1.msra.mxu0 %v63
  %1167 = vmatprep.subr.mxu0 0.0
  %1168 = vmatpush1.msra.mxu0 %v66
  %1169 = vmatprep.subr.mxu0 0.0
  %1170 = vmatpush1.msra.mxu0 %v69
  %1171 = vmatprep.subr.mxu0 0.0
  %1172 = vmatpush1.msra.mxu0 %v72
  %1173 = vmatprep.subr.mxu0 0.0
  %1174 = vmatpush1.msra.mxu0 %v75
  %1175 = vmatprep.subr.mxu0 0.0
  %1176 = vmatpush1.msra.mxu0 %v78
  %1177 = vmatprep.subr.mxu0 0.0
  %1178 = vmatpush1.msra.mxu0 %v81
  %1179 = vmatprep.subr.mxu0 0.0
  %1180 = vmatpush1.msra.mxu0 %v84
  %1181 = vmatprep.subr.mxu0 0.0
  %1182 = vmatpush1.msra.mxu0 %v87
  %1183 = vmatprep.subr.mxu0 0.0
  %1184 = vmatpush1.msra.mxu0 %v90
  %1185 = vmatprep.subr.mxu0 0.0
  %1186 = vmatpush1.msra.mxu0 %v93
  %1187 = vmatprep.subr.mxu0 0.0
  %1188 = vmatpush1.msra.mxu0 0.0
  %1189 = vmatprep.subr.mxu0 0.0
  %1190 = vmatpush1.msra.mxu0 0.0
  %1191 = vmatprep.subr.mxu0 0.0
  %1192 = vmatpush1.msra.mxu0 0.0
  %1193 = vmatprep.subr.mxu0 0.0
  %1194 = vmatpush1.msra.mxu0 0.0
  %1195 = vmatprep.subr.mxu0 0.0
  %1196 = vmatpush1.msra.mxu0 0.0
  %1197 = vmatprep.subr.mxu0 0.0
  %1198 = vmatpush1.msra.mxu0 0.0
  %1199 = vmatprep.subr.mxu0 0.0
  %1200 = vmatpush1.msra.mxu0 0.0
  %1201 = vmatprep.subr.mxu0 0.0
  %1202 = vmatpush1.msra.mxu0 0.0
  %1203 = vmatprep.subr.mxu0 0.0
  %1204 = vmatpush1.msra.mxu0 0.0
  %1205 = vmatprep.subr.mxu0 0.0
  %1206 = vmatpush1.msra.mxu0 0.0
  %1207 = vmatprep.subr.mxu0 0.0
  %1208 = vmatpush1.msra.mxu0 0.0
  %1209 = vmatprep.subr.mxu0 0.0
  %1210 = vmatpush1.msra.mxu0 0.0
  %1211 = vmatprep.subr.mxu0 0.0
  %1212 = vmatpush1.msra.mxu0 0.0
  %1213 = vmatprep.subr.mxu0 0.0
  %1214 = vmatpush1.msra.mxu0 0.0
  %1215 = vmatprep.subr.mxu0 0.0
  %1216 = vmatpush1.msra.mxu0 0.0
  %1217 = vmatprep.subr.mxu0 0.0
  %1218 = vmatpush1.msra.mxu0 0.0
  %1219 = vmatprep.mubr.f32.mxu0 0.0
  %1220 = vmatmul.mubr.f32.gmra.mrb[0].mxu0 %v1079
  %v1221 = vpop.f32.mrb[0].mxu0
  %v1222 = vadd.f32 %v38, %v1221
  %v1223 = vpop.f32.mrb[0].mxu0
  %1224 = vdwg.mxu0
  %v1225 = vadd.f32 %v1081, %v1151
  %v1226 = vsub.f32 0.0, %v1225
  %v1227 = vmul.f32 %v1226, 1.442695
  %v1228 = vpow.pop %v1227
  %v1229 = vadd.f32 %v1228, 1.0
  %v1230 = vrcp.pop %v1229
  %v1231 = vmul.f32 1.0, %v1230
  %v1232 = vadd.f32 %v1082, %v1153
  %v1233 = vsub.f32 0.0, %v1232
  %v1234 = vmul.f32 %v1233, 1.442695
  %v1235 = vpow.pop %v1234
  %v1236 = vadd.f32 %v1235, 1.0
  %v1237 = vrcp.pop %v1236
  %v1238 = vmul.f32 1.0, %v1237
  %v1239 = vmul.f32 %v1231, %v1222
  %v1240 = vadd.f32 %v1083, %v1239
  %v1241 = vtanh.pop %v1240
  %v1242 = vsub.f32 %v1079, %v1241
  %v1243 = vmul.f32 %v1238, %v1242
  %v1244 = vadd.f32 %v1241, %v1243
  %s1245 = scalar_lea.vmem %s0, 168
  %v1246 = vld [vmem:[%s1245] sm:$0xff]
  %v1247 = vld [vmem:[%s1245 + $0x8] sm:$0xff]
  %v1248 = vld [vmem:[%s1245 + $0x10] sm:$0xff]
  %1249 = vmatprep.subr.mxu0 %v47
  %1250 = vmatpush1.msra.mxu0 %v46
  %1251 = vmatprep.subr.mxu0 %v50
  %1252 = vmatpush1.msra.mxu0 %v49
  %1253 = vmatprep.subr.mxu0 %v53
  %1254 = vmatpush1.msra.mxu0 %v52
  %1255 = vmatprep.subr.mxu0 %v56
  %1256 = vmatpush1.msra.mxu0 %v55
  %1257 = vmatprep.subr.mxu0 %v59
  %1258 = vmatpush1.msra.mxu0 %v58
  %1259 = vmatprep.subr.mxu0 %v62
  %1260 = vmatpush1.msra.mxu0 %v61
  %1261 = vmatprep.subr.mxu0 %v65
  %1262 = vmatpush1.msra.mxu0 %v64
  %1263 = vmatprep.subr.mxu0 %v68
  %1264 = vmatpush1.msra.mxu0 %v67
  %1265 = vmatprep.subr.mxu0 %v71
  %1266 = vmatpush1.msra.mxu0 %v70
  %1267 = vmatprep.subr.mxu0 %v74
  %1268 = vmatpush1.msra.mxu0 %v73
  %1269 = vmatprep.subr.mxu0 %v77
  %1270 = vmatpush1.msra.mxu0 %v76
  %1271 = vmatprep.subr.mxu0 %v80
  %1272 = vmatpush1.msra.mxu0 %v79
  %1273 = vmatprep.subr.mxu0 %v83
  %1274 = vmatpush1.msra.mxu0 %v82
  %1275 = vmatprep.subr.mxu0 %v86
  %1276 = vmatpush1.msra.mxu0 %v85
  %1277 = vmatprep.subr.mxu0 %v89
  %1278 = vmatpush1.msra.mxu0 %v88
  %1279 = vmatprep.subr.mxu0 %v92
  %1280 = vmatpush1.msra.mxu0 %v91
  %1281 = vmatprep.subr.mxu0 0.0
  %1282 = vmatpush1.msra.mxu0 0.0
  %1283 = vmatprep.subr.mxu0 0.0
  %1284 = vmatpush1.msra.mxu0 0.0
  %1285 = vmatprep.subr.mxu0 0.0
  %1286 = vmatpush1.msra.mxu0 0.0
  %1287 = vmatprep.subr.mxu0 0.0
  %1288 = vmatpush1.msra.mxu0 0.0
  %1289 = vmatprep.subr.mxu0 0.0
  %1290 = vmatpush1.msra.mxu0 0.0
  %1291 = vmatprep.subr.mxu0 0.0
  %1292 = vmatpush1.msra.mxu0 0.0
  %1293 = vmatprep.subr.mxu0 0.0
  %1294 = vmatpush1.msra.mxu0 0.0
  %1295 = vmatprep.subr.mxu0 0.0
  %1296 = vmatpush1.msra.mxu0 0.0
  %1297 = vmatprep.subr.mxu0 0.0
  %1298 = vmatpush1.msra.mxu0 0.0
  %1299 = vmatprep.subr.mxu0 0.0
  %1300 = vmatpush1.msra.mxu0 0.0
  %1301 = vmatprep.subr.mxu0 0.0
  %1302 = vmatpush1.msra.mxu0 0.0
  %1303 = vmatprep.subr.mxu0 0.0
  %1304 = vmatpush1.msra.mxu0 0.0
  %1305 = vmatprep.subr.mxu0 0.0
  %1306 = vmatpush1.msra.mxu0 0.0
  %1307 = vmatprep.subr.mxu0 0.0
  %1308 = vmatpush1.msra.mxu0 0.0
  %1309 = vmatprep.subr.mxu0 0.0
  %1310 = vmatpush1.msra.mxu0 0.0
  %1311 = vmatprep.subr.mxu0 0.0
  %1312 = vmatpush1.msra.mxu0 0.0
  %1313 = vmatprep.mubr.f32.mxu0 0.0
  %1314 = vmatmul.mubr.f32.gmra.mrb[0].mxu0 %v1244
  %v1315 = vpop.f32.mrb[0].mxu0
  %v1316 = vadd.f32 %v30, %v1315
  %v1317 = vpop.f32.mrb[0].mxu0
  %v1318 = vadd.f32 %v34, %v1317
  %1319 = vdwg.mxu0
  %1320 = vmatprep.subr.mxu0 0.0
  %1321 = vmatpush1.msra.mxu0 %v48
  %1322 = vmatprep.subr.mxu0 0.0
  %1323 = vmatpush1.msra.mxu0 %v51
  %1324 = vmatprep.subr.mxu0 0.0
  %1325 = vmatpush1.msra.mxu0 %v54
  %1326 = vmatprep.subr.mxu0 0.0
  %1327 = vmatpush1.msra.mxu0 %v57
  %1328 = vmatprep.subr.mxu0 0.0
  %1329 = vmatpush1.msra.mxu0 %v60
  %1330 = vmatprep.subr.mxu0 0.0
  %1331 = vmatpush1.msra.mxu0 %v63
  %1332 = vmatprep.subr.mxu0 0.0
  %1333 = vmatpush1.msra.mxu0 %v66
  %1334 = vmatprep.subr.mxu0 0.0
  %1335 = vmatpush1.msra.mxu0 %v69
  %1336 = vmatprep.subr.mxu0 0.0
  %1337 = vmatpush1.msra.mxu0 %v72
  %1338 = vmatprep.subr.mxu0 0.0
  %1339 = vmatpush1.msra.mxu0 %v75
  %1340 = vmatprep.subr.mxu0 0.0
  %1341 = vmatpush1.msra.mxu0 %v78
  %1342 = vmatprep.subr.mxu0 0.0
  %1343 = vmatpush1.msra.mxu0 %v81
  %1344 = vmatprep.subr.mxu0 0.0
  %1345 = vmatpush1.msra.mxu0 %v84
  %1346 = vmatprep.subr.mxu0 0.0
  %1347 = vmatpush1.msra.mxu0 %v87
  %1348 = vmatprep.subr.mxu0 0.0
  %1349 = vmatpush1.msra.mxu0 %v90
  %1350 = vmatprep.subr.mxu0 0.0
  %1351 = vmatpush1.msra.mxu0 %v93
  %1352 = vmatprep.subr.mxu0 0.0
  %1353 = vmatpush1.msra.mxu0 0.0
  %1354 = vmatprep.subr.mxu0 0.0
  %1355 = vmatpush1.msra.mxu0 0.0
  %1356 = vmatprep.subr.mxu0 0.0
  %1357 = vmatpush1.msra.mxu0 0.0
  %1358 = vmatprep.subr.mxu0 0.0
  %1359 = vmatpush1.msra.mxu0 0.0
  %1360 = vmatprep.subr.mxu0 0.0
  %1361 = vmatpush1.msra.mxu0 0.0
  %1362 = vmatprep.subr.mxu0 0.0
  %1363 = vmatpush1.msra.mxu0 0.0
  %1364 = vmatprep.subr.mxu0 0.0
  %1365 = vmatpush1.msra.mxu0 0.0
  %1366 = vmatprep.subr.mxu0 0.0
  %1367 = vmatpush1.msra.mxu0 0.0
  %1368 = vmatprep.subr.mxu0 0.0
  %1369 = vmatpush1.msra.mxu0 0.0
  %1370 = vmatprep.subr.mxu0 0.0
  %1371 = vmatpush1.msra.mxu0 0.0
  %1372 = vmatprep.subr.mxu0 0.0
  %1373 = vmatpush1.msra.mxu0 0.0
  %1374 = vmatprep.subr.mxu0 0.0
  %1375 = vmatpush1.msra.mxu0 0.0
  %1376 = vmatprep.subr.mxu0 0.0
  %1377 = vmatpush1.msra.mxu0 0.0
  %1378 = vmatprep.subr.mxu0 0.0
  %1379 = vmatpush1.msra.mxu0 0.0
  %1380 = vmatprep.subr.mxu0 0.0
  %1381 = vmatpush1.msra.mxu0 0.0
  %1382 = vmatprep.subr.mxu0 0.0
  %1383 = vmatpush1.msra.mxu0 0.0
  %1384 = vmatprep.mubr.f32.mxu0 0.0
  %1385 = vmatmul.mubr.f32.gmra.mrb[0].mxu0 %v1244
  %v1386 = vpop.f32.mrb[0].mxu0
  %v1387 = vadd.f32 %v38, %v1386
  %v1388 = vpop.f32.mrb[0].mxu0
  %1389 = vdwg.mxu0
  %v1390 = vadd.f32 %v1246, %v1316
  %v1391 = vsub.f32 0.0, %v1390
  %v1392 = vmul.f32 %v1391, 1.442695
  %v1393 = vpow.pop %v1392
  %v1394 = vadd.f32 %v1393, 1.0
  %v1395 = vrcp.pop %v1394
  %v1396 = vmul.f32 1.0, %v1395
  %v1397 = vadd.f32 %v1247, %v1318
  %v1398 = vsub.f32 0.0, %v1397
  %v1399 = vmul.f32 %v1398, 1.442695
  %v1400 = vpow.pop %v1399
  %v1401 = vadd.f32 %v1400, 1.0
  %v1402 = vrcp.pop %v1401
  %v1403 = vmul.f32 1.0, %v1402
  %v1404 = vmul.f32 %v1396, %v1387
  %v1405 = vadd.f32 %v1248, %v1404
  %v1406 = vtanh.pop %v1405
  %v1407 = vsub.f32 %v1244, %v1406
  %v1408 = vmul.f32 %v1403, %v1407
  %v1409 = vadd.f32 %v1406, %v1408
  %1410 = vst [vmem:[#allocation2] sm:$0xff] %v1409
  // Predicated region
  $region26: #{encoder_forward.1} parent=0 // pred_check
    %p1411 = pneg %p20
  $region27: #{encoder_forward.1} parent=0 // pred_check_branch
    %1413 = sbr.rel (%p1411) target = $region29
  $region28: #{encoder_forward.1} parent=0 // pred_region
    %v1414 = vld [vmem:[%s3] sm:$0xff]
    %v1415 = vld [vmem:[%s3 + $0x8] sm:$0xff]
    %v1416 = vld [vmem:[%s3 + $0x10] sm:$0xff]
    %v1417 = vld [vmem:[%s3 + $0x18] sm:$0xff]
    %v1418 = vld [vmem:[%s3 + $0x20] sm:$0xff]
    %v1419 = vld [vmem:[%s3 + $0x28] sm:$0xff]
    %v1420 = vld [vmem:[%s3 + $0x30] sm:$0xff]
    %v1421 = vld [vmem:[%s3 + $0x38] sm:$0xff]
    %v1422 = vld [vmem:[%s3 + $0x40] sm:$0xff]
    %v1423 = vld [vmem:[%s3 + $0x48] sm:$0xff]
    %v1424 = vld [vmem:[%s3 + $0x50] sm:$0xff]
    %v1425 = vld [vmem:[%s3 + $0x58] sm:$0xff]
    %v1426 = vld [vmem:[%s3 + $0x60] sm:$0xff]
    %v1427 = vld [vmem:[%s3 + $0x68] sm:$0xff]
    %v1428 = vld [vmem:[%s3 + $0x70] sm:$0xff]
    %v1429 = vld [vmem:[%s3 + $0x78] sm:$0xff]
    %v1430 = vld [vmem:[%s4] sm:$0x1]
    %v1432 = vlaneseq
    %v1433 = vshrl.u32 %v1432, 7
    %v1434 = vsub.s32 0, %v1433
    %v1435 = vrot.slane %v1430, %v1434
    %1437 = vmatprep.subr.mxu0 0.0
    %1438 = vmatpush1.msra.mxu0 %v1414
    %1439 = vmatprep.subr.mxu0 0.0
    %1440 = vmatpush1.msra.mxu0 %v1415
    %1441 = vmatprep.subr.mxu0 0.0
    %1442 = vmatpush1.msra.mxu0 %v1416
    %1443 = vmatprep.subr.mxu0 0.0
    %1444 = vmatpush1.msra.mxu0 %v1417
    %1445 = vmatprep.subr.mxu0 0.0
    %1446 = vmatpush1.msra.mxu0 %v1418
    %1447 = vmatprep.subr.mxu0 0.0
    %1448 = vmatpush1.msra.mxu0 %v1419
    %1449 = vmatprep.subr.mxu0 0.0
    %1450 = vmatpush1.msra.mxu0 %v1420
    %1451 = vmatprep.subr.mxu0 0.0
    %1452 = vmatpush1.msra.mxu0 %v1421
    %1453 = vmatprep.subr.mxu0 0.0
    %1454 = vmatpush1.msra.mxu0 %v1422
    %1455 = vmatprep.subr.mxu0 0.0
    %1456 = vmatpush1.msra.mxu0 %v1423
    %1457 = vmatprep.subr.mxu0 0.0
    %1458 = vmatpush1.msra.mxu0 %v1424
    %1459 = vmatprep.subr.mxu0 0.0
    %1460 = vmatpush1.msra.mxu0 %v1425
    %1461 = vmatprep.subr.mxu0 0.0
    %1462 = vmatpush1.msra.mxu0 %v1426
    %1463 = vmatprep.subr.mxu0 0.0
    %1464 = vmatpush1.msra.mxu0 %v1427
    %1465 = vmatprep.subr.mxu0 0.0
    %1466 = vmatpush1.msra.mxu0 %v1428
    %1467 = vmatprep.subr.mxu0 0.0
    %1468 = vmatpush1.msra.mxu0 %v1429
    %1469 = vmatprep.subr.mxu0 0.0
    %1470 = vmatpush1.msra.mxu0 0.0
    %1471 = vmatprep.subr.mxu0 0.0
    %1472 = vmatpush1.msra.mxu0 0.0
    %1473 = vmatprep.subr.mxu0 0.0
    %1474 = vmatpush1.msra.mxu0 0.0
    %1475 = vmatprep.subr.mxu0 0.0
    %1476 = vmatpush1.msra.mxu0 0.0
    %1477 = vmatprep.subr.mxu0 0.0
    %1478 = vmatpush1.msra.mxu0 0.0
    %1479 = vmatprep.subr.mxu0 0.0
    %1480 = vmatpush1.msra.mxu0 0.0
    %1481 = vmatprep.subr.mxu0 0.0
    %1482 = vmatpush1.msra.mxu0 0.0
    %1483 = vmatprep.subr.mxu0 0.0
    %1484 = vmatpush1.msra.mxu0 0.0
    %1485 = vmatprep.subr.mxu0 0.0
    %1486 = vmatpush1.msra.mxu0 0.0
    %1487 = vmatprep.subr.mxu0 0.0
    %1488 = vmatpush1.msra.mxu0 0.0
    %1489 = vmatprep.subr.mxu0 0.0
    %1490 = vmatpush1.msra.mxu0 0.0
    %1491 = vmatprep.subr.mxu0 0.0
    %1492 = vmatpush1.msra.mxu0 0.0
    %1493 = vmatprep.subr.mxu0 0.0
    %1494 = vmatpush1.msra.mxu0 0.0
    %1495 = vmatprep.subr.mxu0 0.0
    %1496 = vmatpush1.msra.mxu0 0.0
    %1497 = vmatprep.subr.mxu0 0.0
    %1498 = vmatpush1.msra.mxu0 0.0
    %1499 = vmatprep.subr.mxu0 0.0
    %1500 = vmatpush1.msra.mxu0 0.0
    %1501 = vmatprep.mubr.f32.mxu0 0.0
    %1502 = vmatmul.mubr.f32.gmra.mrb[0].mxu0 %v1409
    %v1503 = vpop.f32.mrb[0].mxu0
    %v1504 = vadd.f32 %v1435, %v1503
    %v1505 = vpop.f32.mrb[0].mxu0
    %1506 = vdwg.mxu0
    %1507 = vst [vmem:[%s5] sm:$0xff] %v1504
  $region29: #{encoder_forward.1} parent=0 // pred_fallthru
    _
  // Predicated region
  $region30: #{encoder_forward.1} parent=0 // pred_check
    _
  $region31: #{encoder_forward.1} parent=0 // pred_check_branch
    %1509 = sbr.rel (0) target = $region33
  $region32: #{encoder_forward.1} parent=0 // pred_region
    _
  $region33: #{encoder_forward.1} parent=0 // pred_fallthru
    _
  // Predicated region
  $region34: #{encoder_forward.1} parent=0 // pred_check
    _
  $region35: #{encoder_forward.1} parent=0 // pred_check_branch
    %1511 = sbr.rel (0) target = $region37
  $region36: #{encoder_forward.1} parent=0 // pred_region
    _
  $region37: #{encoder_forward.1} parent=0 // pred_fallthru
    _

</llo_original>
